<compile_context>
chip_gen: v6e
topology: v6e:2x2x1
jax: 0.10.0
libtpu: 0.0.40
codegen_flags: <defaults>
</compile_context>

<pallas_src>
import functools

import jax
import jax.numpy as jnp
from jax import lax
from jax.experimental import pallas as pl
from jax.experimental.pallas import tpu as pltpu

NEG_SLOPE = 0.01  # nn.LeakyReLU default negative_slope


# ----------------------------- Pallas kernel ------------------------------
def _recurrent_kernel(x_ref, wfc_ref, bfc_ref, wbig_ref, bbig_ref,
                      wcomb_ref, len_ref, out_ref, g_scr, *, seq_len, hidden):
    """One batch tile.

    x_ref    : (T, BT, Fin)  time-major batch tile (f32)
    wfc_ref  : (Fin, H)      fc weight, pre-transposed (bf16)
    bfc_ref  : (1, H)        fc bias (f32)
    wbig_ref : (H, 8H)       stage-1 weight (bf16): layer-1 input gates placed
                             into the per-step column layout (zero cols elsewhere)
    bbig_ref : (1, 8H)       stage-1 bias: every GRU bias, pre-summed & placed
    wcomb_ref: (2H, 8H)      fused per-step weight (bf16), LHS = [h1 | h2]
    len_ref  : (BT, 1) int32 valid lengths
    out_ref  : (BT, 2H)      final [h1 | h2]; wrapper slices layer-2 half
    g_scr    : (T*BT, 8H)    precomputed per-step gate/bias slab (f32)

    summed column layout (8H) used each step (and in the scratch):
      [0:H]  r1 pre-act   [H:2H]  r2 pre-act   [2H:3H] z1   [3H:4H] z2
      [4H:5H] n1 free     [5H:6H] n2 free      [6H:7H] n1 gated  [7H:8H] n2 gated
    """
    T = seq_len
    H = hidden
    BT = out_ref.shape[0]

    # ---- Stage 1: bulk precompute (two large-M bf16 MXU matmuls). ----------
    x = x_ref[...].reshape(T * BT, x_ref.shape[-1])          # merge whole tiles
    y = jnp.dot(x.astype(jnp.bfloat16), wfc_ref[...],
                preferred_element_type=jnp.float32) + bfc_ref[...]
    y = jnp.where(y > 0, y, NEG_SLOPE * y)                   # LeakyReLU (f32)
    g_scr[...] = jnp.dot(y.astype(jnp.bfloat16), wbig_ref[...],
                         preferred_element_type=jnp.float32) + bbig_ref[...]

    # ---- Hoisted loop invariants. -------------------------------------------
    w_comb = wcomb_ref[...]                                   # (2H, 8H) bf16
    lengths = len_ref[...]                                    # (BT, 1) int32
    # lane_off = 1 on the layer-1 half of the 2H lanes, 0 on the layer-2 half.
    lane_off = (lax.broadcasted_iota(jnp.int32, (1, 2 * H), 1) < H).astype(jnp.int32)

    def cell_pair(summed, h12, mask):
        # Both GRU cells evaluated jointly at 2H lane width.
        rz = jax.nn.sigmoid(summed[:, :4 * H])                # [r1|r2|z1|z2]
        r12 = rz[:, :2 * H]
        z12 = rz[:, 2 * H:]
        n12 = jnp.tanh(summed[:, 4 * H:6 * H] + r12 * summed[:, 6 * H:])
        cand = n12 + z12 * (h12 - n12)                        # (1-z)*n + z*h
        return jnp.where(mask, cand, h12)

    # ---- Prologue: h1(0) (gh1(0)=bias only, already folded into g_scr[0]);
    #      h2 half masked off so it stays 0. ---------------------------------
    h12 = jnp.zeros((BT, 2 * H), jnp.float32)                 # [h1 | h2]
    mask0 = (lengths > 0) & (lane_off > 0)
    h12 = cell_pair(g_scr[pl.ds(0, BT), :], h12, mask0)

    # ---- Stage 2: recurrence, ONE fused MXU push per step. ------------------
    # Carry invariant at iteration k: h12 = [h1(k) | h2(k-1)].
    # big provides gh1(k+1) and the layer-2 gates of step k; the precomputed
    # slice for step k+1 supplies gi1(k+1) and every bias in one 8H-wide add.
    def step(k, h12):
        big = jnp.dot(h12.astype(jnp.bfloat16), w_comb,
                      preferred_element_type=jnp.float32)     # (BT, 8H) f32
        kp1 = jnp.minimum(k + 1, T - 1)   # clamp: layer-1 half is masked off at k=T-1
        row = pl.multiple_of(kp1 * BT, BT)
        summed = big + g_scr[pl.ds(row, BT), :]
        mask = lengths > (k + lane_off)   # L1 half: len > k+1, L2 half: len > k
        return cell_pair(summed, h12, mask)

    unroll = True if T <= 32 else 8       # full unroll for short fixed T
    h12 = lax.fori_loop(0, T, step, h12, unroll=unroll)
    out_ref[...] = h12                    # [:, H:2H] is the final layer-2 hidden


# ------------------------------ weight prep --------------------------------
def _prep_params(params):
    """Pre-transpose / fuse / bias-fold weights; MXU operands cast to bf16."""
    H = params["w_fc"].shape[0]
    f32, bf16 = jnp.float32, jnp.bfloat16
    zHH = jnp.zeros((H, H), f32)

    wih1 = params["w_ih_l0"].astype(f32)   # (3H, H), gate rows [r; z; n]
    whh1 = params["w_hh_l0"].astype(f32)
    wih2 = params["w_ih_l1"].astype(f32)
    whh2 = params["w_hh_l1"].astype(f32)
    bih1 = params["b_ih_l0"].astype(f32)
    bhh1 = params["b_hh_l0"].astype(f32)
    bih2 = params["b_ih_l1"].astype(f32)
    bhh2 = params["b_hh_l1"].astype(f32)

    def blk(w, i):                          # transposed (H,H) block of gate i
        return w[i * H:(i + 1) * H].T

    wfc_t = params["w_fc"].T.astype(bf16)                     # (Fin, H)
    bfc = params["b_fc"].reshape(1, H).astype(f32)

    # Stage-1 weight: y -> [gi1_r, 0, gi1_z, 0, gi1_n, 0, 0, 0]   (H, 8H)
    w_big = jnp.concatenate(
        [blk(wih1, 0), zHH, blk(wih1, 1), zHH, blk(wih1, 2), zHH, zHH, zHH],
        axis=1)
    # Stage-1 bias: every per-step bias constant, placed in the summed layout.
    b_big = jnp.concatenate([
        bih1[0:H] + bhh1[0:H],              # r1
        bih2[0:H] + bhh2[0:H],              # r2
        bih1[H:2 * H] + bhh1[H:2 * H],      # z1
        bih2[H:2 * H] + bhh2[H:2 * H],      # z2
        bih1[2 * H:3 * H],                  # n1 free
        bih2[2 * H:3 * H],                  # n2 free
        bhh1[2 * H:3 * H],                  # n1 gated
        bhh2[2 * H:3 * H],                  # n2 gated
    ]).reshape(1, 8 * H)

    # Per-step fused weight (2H, 8H), LHS = [h1 | h2]:
    top = jnp.concatenate(
        [blk(whh1, 0), blk(wih2, 0), blk(whh1, 1), blk(wih2, 1),
         zHH, blk(wih2, 2), blk(whh1, 2), zHH], axis=1)
    bot = jnp.concatenate(
        [zHH, blk(whh2, 0), zHH, blk(whh2, 1),
         zHH, zHH, zHH, blk(whh2, 2)], axis=1)
    w_comb = jnp.concatenate([top, bot], axis=0)              # (2H, 8H)

    return wfc_t, bfc, w_big.astype(bf16), b_big, w_comb.astype(bf16)


# ------------------------------- wrapper ----------------------------------
def recurrent_net_forward(x, lengths, params, *, batch_tile=None):
    T, B, Fin = x.shape
    H = params["w_fc"].shape[0]

    if batch_tile is None:
        # Largest tile up to 128 rows with minimal padding: fills MXU rows and
        # keeps one serial T-loop per tile.  B > 128 => n_tiles >= 2, letting
        # the "parallel" grid axis shard across both v7x TensorCores.
        n_tiles = (B + 127) // 128
        per_tile = (B + n_tiles - 1) // n_tiles
        batch_tile = ((per_tile + 7) // 8) * 8
    BT = ((batch_tile + 7) // 8) * 8
    n_tiles = (B + BT - 1) // BT
    Bp = n_tiles * BT                       # padded rows get length 0 -> h stays 0

    x_p = jnp.zeros((T, Bp, Fin), jnp.float32).at[:, :B, :].set(x.astype(jnp.float32))
    len_p = jnp.zeros((Bp, 1), jnp.int32).at[:B, 0].set(lengths.astype(jnp.int32))

    wfc_t, bfc, w_big, b_big, w_comb = _prep_params(params)

    def full(a):
        return pl.BlockSpec(a.shape, lambda i: (0,) * a.ndim)

    kernel = functools.partial(_recurrent_kernel, seq_len=T, hidden=H)

    out = pl.pallas_call(
        kernel,
        out_shape=jax.ShapeDtypeStruct((Bp, 2 * H), jnp.float32),
        grid_spec=pltpu.PrefetchScalarGridSpec(
            num_scalar_prefetch=0,
            grid=(n_tiles,),
            in_specs=[
                pl.BlockSpec((T, BT, Fin), lambda i: (0, i, 0)),   # x batch tile
                full(wfc_t), full(bfc),
                full(w_big), full(b_big), full(w_comb),
                pl.BlockSpec((BT, 1), lambda i: (i, 0)),           # lengths tile
            ],
            out_specs=pl.BlockSpec((BT, 2 * H), lambda i: (i, 0)),
            scratch_shapes=[pltpu.VMEM((T * BT, 8 * H), jnp.float32)],
        ),
        compiler_params=pltpu.CompilerParams(
            dimension_semantics=("parallel",),   # batch tiles shard across TCs
            # Ample for these shapes; on v5e/v6e (128 MiB VMEM) raise this for
            # long T / big BT instead of shrinking tiles; on v7x chunk stage 1.
            vmem_limit_bytes=32 * 1024 * 1024,
        ),
    )(x_p, wfc_t, bfc, w_big, b_big, w_comb, len_p)
    return out[:B, H:2 * H]


# ---------------------- deterministic parameter init ----------------------
def init_params(key, in_feature, out_feature):
    H = out_feature
    ks = jax.random.split(key, 10)

    def u(k, shape, bound):
        return jax.random.uniform(k, shape, jnp.float32, -bound, bound)

    b_fc = 1.0 / (in_feature ** 0.5)
    b_g = 1.0 / (H ** 0.5)
    return {
        "w_fc": u(ks[0], (H, in_feature), b_fc),
        "b_fc": u(ks[1], (H,), b_fc),
        "w_ih_l0": u(ks[2], (3 * H, H), b_g),
        "w_hh_l0": u(ks[3], (3 * H, H), b_g),
        "b_ih_l0": u(ks[4], (3 * H,), b_g),
        "b_hh_l0": u(ks[5], (3 * H,), b_g),
        "w_ih_l1": u(ks[6], (3 * H, H), b_g),
        "w_hh_l1": u(ks[7], (3 * H, H), b_g),
        "b_ih_l1": u(ks[8], (3 * H,), b_g),
        "b_hh_l1": u(ks[9], (3 * H,), b_g),
    }


# ----------------------- pure-JAX reference (check) ------------------------
def reference_forward(x, lengths, params):
    T, B, _ = x.shape
    H = params["w_fc"].shape[0]
    y = x @ params["w_fc"].T + params["b_fc"]
    y = jnp.where(y > 0, y, NEG_SLOPE * y)

    def gru_cell(x_t, h, wih, whh, bih, bhh):
        gi = x_t @ wih.T + bih
        gh = h @ whh.T + bhh
        r = jax.nn.sigmoid(gi[:, :H] + gh[:, :H])
        z = jax.nn.sigmoid(gi[:, H:2 * H] + gh[:, H:2 * H])
        n = jnp.tanh(gi[:, 2 * H:] + r * gh[:, 2 * H:])
        return (1.0 - z) * n + z * h

    def step(carry, inp):
        h1, h2 = carry
        x_t, t = inp
        mask = (lengths > t)[:, None]
        h1n = gru_cell(x_t, h1, params["w_ih_l0"], params["w_hh_l0"],
                       params["b_ih_l0"], params["b_hh_l0"])
        h1 = jnp.where(mask, h1n, h1)
        h2n = gru_cell(h1, h2, params["w_ih_l1"], params["w_hh_l1"],
                       params["b_ih_l1"], params["b_hh_l1"])
        h2 = jnp.where(mask, h2n, h2)
        return (h1, h2), None

    h0 = jnp.zeros((B, H), jnp.float32)
    (_, h2), _ = lax.scan(step, (h0, h0), (y, jnp.arange(T)))
    return h2


if __name__ == "__main__":
    in_feature, out_feature = 16, 32
    T, B = 8, 2

    key = jax.random.PRNGKey(0)
    kx, kp = jax.random.split(key)
    x = jax.random.normal(kx, (T, B, in_feature), jnp.float32)
    # pack_padded_sequence(enforce_sorted=True) expects descending lengths
    lengths = jnp.array([8, 5], dtype=jnp.int32)
    params = init_params(kp, in_feature, out_feature)

    out = recurrent_net_forward(x, lengths, params)
    out = jax.block_until_ready(out)

    ref = reference_forward(x, lengths, params)
    assert out.shape == (B, out_feature)
    # bf16 MXU operands (f32 accumulation) vs an f32 reference -> looser tol.
    assert jnp.allclose(out, ref, atol=5e-2, rtol=5e-2), (
        "mismatch vs JAX reference; max abs diff = %r"
        % float(jnp.max(jnp.abs(out - ref))))
    print("KERNEL_OK")
</pallas_src>

<mosaic_0001>
module attributes {stable_mosaic.version = 11 : i64} {
  func.func @_recurrent_kernel(%arg0: i32, %arg1: memref<8x8x16xf32, #tpu.memory_space<vmem>>, %arg2: memref<16x32xbf16, #tpu.memory_space<vmem>>, %arg3: memref<1x32xf32, #tpu.memory_space<vmem>>, %arg4: memref<32x256xbf16, #tpu.memory_space<vmem>>, %arg5: memref<1x256xf32, #tpu.memory_space<vmem>>, %arg6: memref<64x256xbf16, #tpu.memory_space<vmem>>, %arg7: memref<8x1xi32, #tpu.memory_space<vmem>>, %arg8: memref<8x64xf32, #tpu.memory_space<vmem>>, %arg9: memref<64x256xf32, #tpu.memory_space<vmem>>) attributes {dimension_semantics = [#tpu.dimension_semantics<parallel>], iteration_bounds = array<i64: 1>, scalar_prefetch = 0 : i64, scratch_operands = 1 : i64, tpu.core_type = #tpu.core_type<tc>, window_params = [{transform_indices = @transform_0, window_bounds = array<i64: 8, 8, 16>}, {pipeline_mode = #tpu.pipeline_mode<synchronous>, transform_indices = @transform_1, window_bounds = array<i64: 16, 32>}, {pipeline_mode = #tpu.pipeline_mode<synchronous>, transform_indices = @transform_2, window_bounds = array<i64: 1, 32>}, {pipeline_mode = #tpu.pipeline_mode<synchronous>, transform_indices = @transform_3, window_bounds = array<i64: 32, 256>}, {pipeline_mode = #tpu.pipeline_mode<synchronous>, transform_indices = @transform_4, window_bounds = array<i64: 1, 256>}, {pipeline_mode = #tpu.pipeline_mode<synchronous>, transform_indices = @transform_5, window_bounds = array<i64: 64, 256>}, {transform_indices = @transform_6, window_bounds = array<i64: 8, 1>}, {transform_indices = @transform_7, window_bounds = array<i64: 8, 64>}]} {
    %c0 = arith.constant 0 : index
    %c0_0 = arith.constant 0 : index
    %c0_1 = arith.constant 0 : index
    %0 = vector.load %arg1[%c0, %c0_0, %c0_1] : memref<8x8x16xf32, #tpu.memory_space<vmem>>, vector<8x8x16xf32>
    %1 = vector.shape_cast %0 : vector<8x8x16xf32> to vector<64x16xf32>
    %2 = arith.truncf %1 : vector<64x16xf32> to vector<64x16xbf16>
    %c0_2 = arith.constant 0 : index
    %c0_3 = arith.constant 0 : index
    %3 = vector.load %arg2[%c0_2, %c0_3] : memref<16x32xbf16, #tpu.memory_space<vmem>>, vector<16x32xbf16>
    %cst = arith.constant dense<0.000000e+00> : vector<64x32xf32>
    %4 = tpu.matmul %2, %3, %cst {dimension_numbers = #tpu.dot_dimension_numbers<[1], [0], [0], [1], [0, 0, 1, 1], [], []>} : vector<64x16xbf16>, vector<16x32xbf16>, vector<64x32xf32> -> vector<64x32xf32>
    %c0_4 = arith.constant 0 : index
    %c0_5 = arith.constant 0 : index
    %5 = vector.load %arg3[%c0_4, %c0_5] : memref<1x32xf32, #tpu.memory_space<vmem>>, vector<1x32xf32>
    %6 = vector.broadcast %5 : vector<1x32xf32> to vector<64x32xf32>
    %7 = arith.addf %4, %6 : vector<64x32xf32>
    %cst_6 = arith.constant 0.000000e+00 : f32
    %8 = vector.broadcast %cst_6 : f32 to vector<64x32xf32>
    %9 = arith.cmpf ogt, %7, %8 : vector<64x32xf32>
    %cst_7 = arith.constant 0.00999999977 : f32
    %10 = vector.broadcast %cst_7 : f32 to vector<64x32xf32>
    %11 = arith.mulf %10, %7 : vector<64x32xf32>
    %12 = arith.select %9, %7, %11 : vector<64x32xi1>, vector<64x32xf32>
    %13 = arith.truncf %12 : vector<64x32xf32> to vector<64x32xbf16>
    %c0_8 = arith.constant 0 : index
    %c0_9 = arith.constant 0 : index
    %14 = vector.load %arg4[%c0_8, %c0_9] : memref<32x256xbf16, #tpu.memory_space<vmem>>, vector<32x256xbf16>
    %cst_10 = arith.constant dense<0.000000e+00> : vector<64x256xf32>
    %15 = tpu.matmul %13, %14, %cst_10 {dimension_numbers = #tpu.dot_dimension_numbers<[1], [0], [0], [1], [0, 0, 1, 1], [], []>} : vector<64x32xbf16>, vector<32x256xbf16>, vector<64x256xf32> -> vector<64x256xf32>
    %c0_11 = arith.constant 0 : index
    %c0_12 = arith.constant 0 : index
    %16 = vector.load %arg5[%c0_11, %c0_12] : memref<1x256xf32, #tpu.memory_space<vmem>>, vector<1x256xf32>
    %17 = vector.broadcast %16 : vector<1x256xf32> to vector<64x256xf32>
    %18 = arith.addf %15, %17 : vector<64x256xf32>
    %c0_13 = arith.constant 0 : index
    %c0_14 = arith.constant 0 : index
    %19 = vector.load %arg9[%c0_13, %c0_14] : memref<64x256xf32, #tpu.memory_space<vmem>>, vector<64x256xf32>
    tpu.vector_store %arg9[%c0_13, %c0_14], %18 {strides = array<i32>} : memref<64x256xf32, #tpu.memory_space<vmem>>, vector<64x256xf32>,
    %c0_15 = arith.constant 0 : index
    %c0_16 = arith.constant 0 : index
    %20 = vector.load %arg6[%c0_15, %c0_16] : memref<64x256xbf16, #tpu.memory_space<vmem>>, vector<64x256xbf16>
    %c0_17 = arith.constant 0 : index
    %c0_18 = arith.constant 0 : index
    %21 = vector.load %arg7[%c0_17, %c0_18] : memref<8x1xi32, #tpu.memory_space<vmem>>, vector<8x1xi32>
    %22 = tpu.iota {dimensions = array<i32: 1>} : vector<1x64xi32>
    %c32_i32 = arith.constant 32 : i32
    %23 = vector.broadcast %c32_i32 : i32 to vector<1x64xi32>
    %24 = arith.cmpi slt, %22, %23 : vector<1x64xi32>
    %25 = arith.extui %24 : vector<1x64xi1> to vector<1x64xi32>
    %cst_19 = arith.constant 0.000000e+00 : f32
    %26 = vector.broadcast %cst_19 : f32 to vector<8x64xf32>
    %c0_i32 = arith.constant 0 : i32
    %27 = vector.broadcast %c0_i32 : i32 to vector<8x1xi32>
    %28 = arith.cmpi sgt, %21, %27 : vector<8x1xi32>
    %c0_i32_20 = arith.constant 0 : i32
    %29 = vector.broadcast %c0_i32_20 : i32 to vector<1x64xi32>
    %30 = arith.cmpi sgt, %25, %29 : vector<1x64xi32>
    %31 = vector.broadcast %28 : vector<8x1xi1> to vector<8x64xi1>
    %32 = vector.broadcast %30 : vector<1x64xi1> to vector<8x64xi1>
    %33 = arith.andi %31, %32 : vector<8x64xi1>
    %c0_21 = arith.constant 0 : index
    %c0_22 = arith.constant 0 : index
    %34 = vector.load %arg9[%c0_21, %c0_22] : memref<64x256xf32, #tpu.memory_space<vmem>>, vector<8x256xf32>
    %35 = vector.extract_strided_slice %34 {offsets = [0, 0], sizes = [8, 128], strides = [1, 1]} : vector<8x256xf32> to vector<8x128xf32>
    %36 = arith.negf %35 : vector<8x128xf32>
    %37 = math.exp %36 : vector<8x128xf32>
    %cst_23 = arith.constant 1.000000e+00 : f32
    %38 = vector.broadcast %cst_23 : f32 to vector<8x128xf32>
    %39 = arith.addf %38, %37 : vector<8x128xf32>
    %40 = arith.divf %38, %39 : vector<8x128xf32>
    %41 = vector.extract_strided_slice %40 {offsets = [0, 0], sizes = [8, 64], strides = [1, 1]} : vector<8x128xf32> to vector<8x64xf32>
    %42 = vector.extract_strided_slice %40 {offsets = [0, 64], sizes = [8, 64], strides = [1, 1]} : vector<8x128xf32> to vector<8x64xf32>
    %43 = vector.extract_strided_slice %34 {offsets = [0, 128], sizes = [8, 64], strides = [1, 1]} : vector<8x256xf32> to vector<8x64xf32>
    %44 = vector.extract_strided_slice %34 {offsets = [0, 192], sizes = [8, 64], strides = [1, 1]} : vector<8x256xf32> to vector<8x64xf32>
    %45 = arith.mulf %41, %44 : vector<8x64xf32>
    %46 = arith.addf %43, %45 : vector<8x64xf32>
    %47 = math.tanh %46 : vector<8x64xf32>
    %48 = arith.subf %26, %47 : vector<8x64xf32>
    %49 = arith.mulf %42, %48 : vector<8x64xf32>
    %50 = arith.addf %47, %49 : vector<8x64xf32>
    %51 = arith.select %33, %50, %26 : vector<8x64xi1>, vector<8x64xf32>
    %c0_i32_24 = arith.constant 0 : i32
    %52 = arith.truncf %51 : vector<8x64xf32> to vector<8x64xbf16>
    %cst_25 = arith.constant dense<0.000000e+00> : vector<8x256xf32>
    %53 = tpu.matmul %52, %20, %cst_25 {dimension_numbers = #tpu.dot_dimension_numbers<[1], [0], [0], [1], [0, 0, 1, 1], [], []>} : vector<8x64xbf16>, vector<64x256xbf16>, vector<8x256xf32> -> vector<8x256xf32>
    %c1_i32 = arith.constant 1 : i32
    %54 = arith.addi %c0_i32_24, %c1_i32 : i32
    %c7_i32 = arith.constant 7 : i32
    %55 = arith.minsi %54, %c7_i32 : i32
    %c8_i32 = arith.constant 8 : i32
    %56 = arith.muli %55, %c8_i32 : i32
    %57 = tpu.assume_multiple %56, 8 : i32
    %58 = arith.index_cast %57 : i32 to index
    %c0_26 = arith.constant 0 : index
    %59 = vector.load %arg9[%58, %c0_26] : memref<64x256xf32, #tpu.memory_space<vmem>>, vector<8x256xf32>
    %60 = arith.addf %53, %59 : vector<8x256xf32>
    %61 = vector.broadcast %c0_i32_24 : i32 to vector<1x64xi32>
    %62 = arith.addi %61, %25 : vector<1x64xi32>
    %63 = vector.broadcast %21 : vector<8x1xi32> to vector<8x64xi32>
    %64 = vector.broadcast %62 : vector<1x64xi32> to vector<8x64xi32>
    %65 = arith.cmpi sgt, %63, %64 : vector<8x64xi32>
    %66 = vector.extract_strided_slice %60 {offsets = [0, 0], sizes = [8, 128], strides = [1, 1]} : vector<8x256xf32> to vector<8x128xf32>
    %67 = arith.negf %66 : vector<8x128xf32>
    %68 = math.exp %67 : vector<8x128xf32>
    %cst_27 = arith.constant 1.000000e+00 : f32
    %69 = vector.broadcast %cst_27 : f32 to vector<8x128xf32>
    %70 = arith.addf %69, %68 : vector<8x128xf32>
    %71 = arith.divf %69, %70 : vector<8x128xf32>
    %72 = vector.extract_strided_slice %71 {offsets = [0, 0], sizes = [8, 64], strides = [1, 1]} : vector<8x128xf32> to vector<8x64xf32>
    %73 = vector.extract_strided_slice %71 {offsets = [0, 64], sizes = [8, 64], strides = [1, 1]} : vector<8x128xf32> to vector<8x64xf32>
    %74 = vector.extract_strided_slice %60 {offsets = [0, 128], sizes = [8, 64], strides = [1, 1]} : vector<8x256xf32> to vector<8x64xf32>
    %75 = vector.extract_strided_slice %60 {offsets = [0, 192], sizes = [8, 64], strides = [1, 1]} : vector<8x256xf32> to vector<8x64xf32>
    %76 = arith.mulf %72, %75 : vector<8x64xf32>
    %77 = arith.addf %74, %76 : vector<8x64xf32>
    %78 = math.tanh %77 : vector<8x64xf32>
    %79 = arith.subf %51, %78 : vector<8x64xf32>
    %80 = arith.mulf %73, %79 : vector<8x64xf32>
    %81 = arith.addf %78, %80 : vector<8x64xf32>
    %82 = arith.select %65, %81, %51 : vector<8x64xi1>, vector<8x64xf32>
    %c1_i32_28 = arith.constant 1 : i32
    %83 = arith.truncf %82 : vector<8x64xf32> to vector<8x64xbf16>
    %cst_29 = arith.constant dense<0.000000e+00> : vector<8x256xf32>
    %84 = tpu.matmul %83, %20, %cst_29 {dimension_numbers = #tpu.dot_dimension_numbers<[1], [0], [0], [1], [0, 0, 1, 1], [], []>} : vector<8x64xbf16>, vector<64x256xbf16>, vector<8x256xf32> -> vector<8x256xf32>
    %c1_i32_30 = arith.constant 1 : i32
    %85 = arith.addi %c1_i32_28, %c1_i32_30 : i32
    %c7_i32_31 = arith.constant 7 : i32
    %86 = arith.minsi %85, %c7_i32_31 : i32
    %c8_i32_32 = arith.constant 8 : i32
    %87 = arith.muli %86, %c8_i32_32 : i32
    %88 = tpu.assume_multiple %87, 8 : i32
    %89 = arith.index_cast %88 : i32 to index
    %c0_33 = arith.constant 0 : index
    %90 = vector.load %arg9[%89, %c0_33] : memref<64x256xf32, #tpu.memory_space<vmem>>, vector<8x256xf32>
    %91 = arith.addf %84, %90 : vector<8x256xf32>
    %92 = vector.broadcast %c1_i32_28 : i32 to vector<1x64xi32>
    %93 = arith.addi %92, %25 : vector<1x64xi32>
    %94 = vector.broadcast %21 : vector<8x1xi32> to vector<8x64xi32>
    %95 = vector.broadcast %93 : vector<1x64xi32> to vector<8x64xi32>
    %96 = arith.cmpi sgt, %94, %95 : vector<8x64xi32>
    %97 = vector.extract_strided_slice %91 {offsets = [0, 0], sizes = [8, 128], strides = [1, 1]} : vector<8x256xf32> to vector<8x128xf32>
    %98 = arith.negf %97 : vector<8x128xf32>
    %99 = math.exp %98 : vector<8x128xf32>
    %cst_34 = arith.constant 1.000000e+00 : f32
    %100 = vector.broadcast %cst_34 : f32 to vector<8x128xf32>
    %101 = arith.addf %100, %99 : vector<8x128xf32>
    %102 = arith.divf %100, %101 : vector<8x128xf32>
    %103 = vector.extract_strided_slice %102 {offsets = [0, 0], sizes = [8, 64], strides = [1, 1]} : vector<8x128xf32> to vector<8x64xf32>
    %104 = vector.extract_strided_slice %102 {offsets = [0, 64], sizes = [8, 64], strides = [1, 1]} : vector<8x128xf32> to vector<8x64xf32>
    %105 = vector.extract_strided_slice %91 {offsets = [0, 128], sizes = [8, 64], strides = [1, 1]} : vector<8x256xf32> to vector<8x64xf32>
    %106 = vector.extract_strided_slice %91 {offsets = [0, 192], sizes = [8, 64], strides = [1, 1]} : vector<8x256xf32> to vector<8x64xf32>
    %107 = arith.mulf %103, %106 : vector<8x64xf32>
    %108 = arith.addf %105, %107 : vector<8x64xf32>
    %109 = math.tanh %108 : vector<8x64xf32>
    %110 = arith.subf %82, %109 : vector<8x64xf32>
    %111 = arith.mulf %104, %110 : vector<8x64xf32>
    %112 = arith.addf %109, %111 : vector<8x64xf32>
    %113 = arith.select %96, %112, %82 : vector<8x64xi1>, vector<8x64xf32>
    %c2_i32 = arith.constant 2 : i32
    %114 = arith.truncf %113 : vector<8x64xf32> to vector<8x64xbf16>
    %cst_35 = arith.constant dense<0.000000e+00> : vector<8x256xf32>
    %115 = tpu.matmul %114, %20, %cst_35 {dimension_numbers = #tpu.dot_dimension_numbers<[1], [0], [0], [1], [0, 0, 1, 1], [], []>} : vector<8x64xbf16>, vector<64x256xbf16>, vector<8x256xf32> -> vector<8x256xf32>
    %c1_i32_36 = arith.constant 1 : i32
    %116 = arith.addi %c2_i32, %c1_i32_36 : i32
    %c7_i32_37 = arith.constant 7 : i32
    %117 = arith.minsi %116, %c7_i32_37 : i32
    %c8_i32_38 = arith.constant 8 : i32
    %118 = arith.muli %117, %c8_i32_38 : i32
    %119 = tpu.assume_multiple %118, 8 : i32
    %120 = arith.index_cast %119 : i32 to index
    %c0_39 = arith.constant 0 : index
    %121 = vector.load %arg9[%120, %c0_39] : memref<64x256xf32, #tpu.memory_space<vmem>>, vector<8x256xf32>
    %122 = arith.addf %115, %121 : vector<8x256xf32>
    %123 = vector.broadcast %c2_i32 : i32 to vector<1x64xi32>
    %124 = arith.addi %123, %25 : vector<1x64xi32>
    %125 = vector.broadcast %21 : vector<8x1xi32> to vector<8x64xi32>
    %126 = vector.broadcast %124 : vector<1x64xi32> to vector<8x64xi32>
    %127 = arith.cmpi sgt, %125, %126 : vector<8x64xi32>
    %128 = vector.extract_strided_slice %122 {offsets = [0, 0], sizes = [8, 128], strides = [1, 1]} : vector<8x256xf32> to vector<8x128xf32>
    %129 = arith.negf %128 : vector<8x128xf32>
    %130 = math.exp %129 : vector<8x128xf32>
    %cst_40 = arith.constant 1.000000e+00 : f32
    %131 = vector.broadcast %cst_40 : f32 to vector<8x128xf32>
    %132 = arith.addf %131, %130 : vector<8x128xf32>
    %133 = arith.divf %131, %132 : vector<8x128xf32>
    %134 = vector.extract_strided_slice %133 {offsets = [0, 0], sizes = [8, 64], strides = [1, 1]} : vector<8x128xf32> to vector<8x64xf32>
    %135 = vector.extract_strided_slice %133 {offsets = [0, 64], sizes = [8, 64], strides = [1, 1]} : vector<8x128xf32> to vector<8x64xf32>
    %136 = vector.extract_strided_slice %122 {offsets = [0, 128], sizes = [8, 64], strides = [1, 1]} : vector<8x256xf32> to vector<8x64xf32>
    %137 = vector.extract_strided_slice %122 {offsets = [0, 192], sizes = [8, 64], strides = [1, 1]} : vector<8x256xf32> to vector<8x64xf32>
    %138 = arith.mulf %134, %137 : vector<8x64xf32>
    %139 = arith.addf %136, %138 : vector<8x64xf32>
    %140 = math.tanh %139 : vector<8x64xf32>
    %141 = arith.subf %113, %140 : vector<8x64xf32>
    %142 = arith.mulf %135, %141 : vector<8x64xf32>
    %143 = arith.addf %140, %142 : vector<8x64xf32>
    %144 = arith.select %127, %143, %113 : vector<8x64xi1>, vector<8x64xf32>
    %c3_i32 = arith.constant 3 : i32
    %145 = arith.truncf %144 : vector<8x64xf32> to vector<8x64xbf16>
    %cst_41 = arith.constant dense<0.000000e+00> : vector<8x256xf32>
    %146 = tpu.matmul %145, %20, %cst_41 {dimension_numbers = #tpu.dot_dimension_numbers<[1], [0], [0], [1], [0, 0, 1, 1], [], []>} : vector<8x64xbf16>, vector<64x256xbf16>, vector<8x256xf32> -> vector<8x256xf32>
    %c1_i32_42 = arith.constant 1 : i32
    %147 = arith.addi %c3_i32, %c1_i32_42 : i32
    %c7_i32_43 = arith.constant 7 : i32
    %148 = arith.minsi %147, %c7_i32_43 : i32
    %c8_i32_44 = arith.constant 8 : i32
    %149 = arith.muli %148, %c8_i32_44 : i32
    %150 = tpu.assume_multiple %149, 8 : i32
    %151 = arith.index_cast %150 : i32 to index
    %c0_45 = arith.constant 0 : index
    %152 = vector.load %arg9[%151, %c0_45] : memref<64x256xf32, #tpu.memory_space<vmem>>, vector<8x256xf32>
    %153 = arith.addf %146, %152 : vector<8x256xf32>
    %154 = vector.broadcast %c3_i32 : i32 to vector<1x64xi32>
    %155 = arith.addi %154, %25 : vector<1x64xi32>
    %156 = vector.broadcast %21 : vector<8x1xi32> to vector<8x64xi32>
    %157 = vector.broadcast %155 : vector<1x64xi32> to vector<8x64xi32>
    %158 = arith.cmpi sgt, %156, %157 : vector<8x64xi32>
    %159 = vector.extract_strided_slice %153 {offsets = [0, 0], sizes = [8, 128], strides = [1, 1]} : vector<8x256xf32> to vector<8x128xf32>
    %160 = arith.negf %159 : vector<8x128xf32>
    %161 = math.exp %160 : vector<8x128xf32>
    %cst_46 = arith.constant 1.000000e+00 : f32
    %162 = vector.broadcast %cst_46 : f32 to vector<8x128xf32>
    %163 = arith.addf %162, %161 : vector<8x128xf32>
    %164 = arith.divf %162, %163 : vector<8x128xf32>
    %165 = vector.extract_strided_slice %164 {offsets = [0, 0], sizes = [8, 64], strides = [1, 1]} : vector<8x128xf32> to vector<8x64xf32>
    %166 = vector.extract_strided_slice %164 {offsets = [0, 64], sizes = [8, 64], strides = [1, 1]} : vector<8x128xf32> to vector<8x64xf32>
    %167 = vector.extract_strided_slice %153 {offsets = [0, 128], sizes = [8, 64], strides = [1, 1]} : vector<8x256xf32> to vector<8x64xf32>
    %168 = vector.extract_strided_slice %153 {offsets = [0, 192], sizes = [8, 64], strides = [1, 1]} : vector<8x256xf32> to vector<8x64xf32>
    %169 = arith.mulf %165, %168 : vector<8x64xf32>
    %170 = arith.addf %167, %169 : vector<8x64xf32>
    %171 = math.tanh %170 : vector<8x64xf32>
    %172 = arith.subf %144, %171 : vector<8x64xf32>
    %173 = arith.mulf %166, %172 : vector<8x64xf32>
    %174 = arith.addf %171, %173 : vector<8x64xf32>
    %175 = arith.select %158, %174, %144 : vector<8x64xi1>, vector<8x64xf32>
    %c4_i32 = arith.constant 4 : i32
    %176 = arith.truncf %175 : vector<8x64xf32> to vector<8x64xbf16>
    %cst_47 = arith.constant dense<0.000000e+00> : vector<8x256xf32>
    %177 = tpu.matmul %176, %20, %cst_47 {dimension_numbers = #tpu.dot_dimension_numbers<[1], [0], [0], [1], [0, 0, 1, 1], [], []>} : vector<8x64xbf16>, vector<64x256xbf16>, vector<8x256xf32> -> vector<8x256xf32>
    %c1_i32_48 = arith.constant 1 : i32
    %178 = arith.addi %c4_i32, %c1_i32_48 : i32
    %c7_i32_49 = arith.constant 7 : i32
    %179 = arith.minsi %178, %c7_i32_49 : i32
    %c8_i32_50 = arith.constant 8 : i32
    %180 = arith.muli %179, %c8_i32_50 : i32
    %181 = tpu.assume_multiple %180, 8 : i32
    %182 = arith.index_cast %181 : i32 to index
    %c0_51 = arith.constant 0 : index
    %183 = vector.load %arg9[%182, %c0_51] : memref<64x256xf32, #tpu.memory_space<vmem>>, vector<8x256xf32>
    %184 = arith.addf %177, %183 : vector<8x256xf32>
    %185 = vector.broadcast %c4_i32 : i32 to vector<1x64xi32>
    %186 = arith.addi %185, %25 : vector<1x64xi32>
    %187 = vector.broadcast %21 : vector<8x1xi32> to vector<8x64xi32>
    %188 = vector.broadcast %186 : vector<1x64xi32> to vector<8x64xi32>
    %189 = arith.cmpi sgt, %187, %188 : vector<8x64xi32>
    %190 = vector.extract_strided_slice %184 {offsets = [0, 0], sizes = [8, 128], strides = [1, 1]} : vector<8x256xf32> to vector<8x128xf32>
    %191 = arith.negf %190 : vector<8x128xf32>
    %192 = math.exp %191 : vector<8x128xf32>
    %cst_52 = arith.constant 1.000000e+00 : f32
    %193 = vector.broadcast %cst_52 : f32 to vector<8x128xf32>
    %194 = arith.addf %193, %192 : vector<8x128xf32>
    %195 = arith.divf %193, %194 : vector<8x128xf32>
    %196 = vector.extract_strided_slice %195 {offsets = [0, 0], sizes = [8, 64], strides = [1, 1]} : vector<8x128xf32> to vector<8x64xf32>
    %197 = vector.extract_strided_slice %195 {offsets = [0, 64], sizes = [8, 64], strides = [1, 1]} : vector<8x128xf32> to vector<8x64xf32>
    %198 = vector.extract_strided_slice %184 {offsets = [0, 128], sizes = [8, 64], strides = [1, 1]} : vector<8x256xf32> to vector<8x64xf32>
    %199 = vector.extract_strided_slice %184 {offsets = [0, 192], sizes = [8, 64], strides = [1, 1]} : vector<8x256xf32> to vector<8x64xf32>
    %200 = arith.mulf %196, %199 : vector<8x64xf32>
    %201 = arith.addf %198, %200 : vector<8x64xf32>
    %202 = math.tanh %201 : vector<8x64xf32>
    %203 = arith.subf %175, %202 : vector<8x64xf32>
    %204 = arith.mulf %197, %203 : vector<8x64xf32>
    %205 = arith.addf %202, %204 : vector<8x64xf32>
    %206 = arith.select %189, %205, %175 : vector<8x64xi1>, vector<8x64xf32>
    %c5_i32 = arith.constant 5 : i32
    %207 = arith.truncf %206 : vector<8x64xf32> to vector<8x64xbf16>
    %cst_53 = arith.constant dense<0.000000e+00> : vector<8x256xf32>
    %208 = tpu.matmul %207, %20, %cst_53 {dimension_numbers = #tpu.dot_dimension_numbers<[1], [0], [0], [1], [0, 0, 1, 1], [], []>} : vector<8x64xbf16>, vector<64x256xbf16>, vector<8x256xf32> -> vector<8x256xf32>
    %c1_i32_54 = arith.constant 1 : i32
    %209 = arith.addi %c5_i32, %c1_i32_54 : i32
    %c7_i32_55 = arith.constant 7 : i32
    %210 = arith.minsi %209, %c7_i32_55 : i32
    %c8_i32_56 = arith.constant 8 : i32
    %211 = arith.muli %210, %c8_i32_56 : i32
    %212 = tpu.assume_multiple %211, 8 : i32
    %213 = arith.index_cast %212 : i32 to index
    %c0_57 = arith.constant 0 : index
    %214 = vector.load %arg9[%213, %c0_57] : memref<64x256xf32, #tpu.memory_space<vmem>>, vector<8x256xf32>
    %215 = arith.addf %208, %214 : vector<8x256xf32>
    %216 = vector.broadcast %c5_i32 : i32 to vector<1x64xi32>
    %217 = arith.addi %216, %25 : vector<1x64xi32>
    %218 = vector.broadcast %21 : vector<8x1xi32> to vector<8x64xi32>
    %219 = vector.broadcast %217 : vector<1x64xi32> to vector<8x64xi32>
    %220 = arith.cmpi sgt, %218, %219 : vector<8x64xi32>
    %221 = vector.extract_strided_slice %215 {offsets = [0, 0], sizes = [8, 128], strides = [1, 1]} : vector<8x256xf32> to vector<8x128xf32>
    %222 = arith.negf %221 : vector<8x128xf32>
    %223 = math.exp %222 : vector<8x128xf32>
    %cst_58 = arith.constant 1.000000e+00 : f32
    %224 = vector.broadcast %cst_58 : f32 to vector<8x128xf32>
    %225 = arith.addf %224, %223 : vector<8x128xf32>
    %226 = arith.divf %224, %225 : vector<8x128xf32>
    %227 = vector.extract_strided_slice %226 {offsets = [0, 0], sizes = [8, 64], strides = [1, 1]} : vector<8x128xf32> to vector<8x64xf32>
    %228 = vector.extract_strided_slice %226 {offsets = [0, 64], sizes = [8, 64], strides = [1, 1]} : vector<8x128xf32> to vector<8x64xf32>
    %229 = vector.extract_strided_slice %215 {offsets = [0, 128], sizes = [8, 64], strides = [1, 1]} : vector<8x256xf32> to vector<8x64xf32>
    %230 = vector.extract_strided_slice %215 {offsets = [0, 192], sizes = [8, 64], strides = [1, 1]} : vector<8x256xf32> to vector<8x64xf32>
    %231 = arith.mulf %227, %230 : vector<8x64xf32>
    %232 = arith.addf %229, %231 : vector<8x64xf32>
    %233 = math.tanh %232 : vector<8x64xf32>
    %234 = arith.subf %206, %233 : vector<8x64xf32>
    %235 = arith.mulf %228, %234 : vector<8x64xf32>
    %236 = arith.addf %233, %235 : vector<8x64xf32>
    %237 = arith.select %220, %236, %206 : vector<8x64xi1>, vector<8x64xf32>
    %c6_i32 = arith.constant 6 : i32
    %238 = arith.truncf %237 : vector<8x64xf32> to vector<8x64xbf16>
    %cst_59 = arith.constant dense<0.000000e+00> : vector<8x256xf32>
    %239 = tpu.matmul %238, %20, %cst_59 {dimension_numbers = #tpu.dot_dimension_numbers<[1], [0], [0], [1], [0, 0, 1, 1], [], []>} : vector<8x64xbf16>, vector<64x256xbf16>, vector<8x256xf32> -> vector<8x256xf32>
    %c1_i32_60 = arith.constant 1 : i32
    %240 = arith.addi %c6_i32, %c1_i32_60 : i32
    %c7_i32_61 = arith.constant 7 : i32
    %241 = arith.minsi %240, %c7_i32_61 : i32
    %c8_i32_62 = arith.constant 8 : i32
    %242 = arith.muli %241, %c8_i32_62 : i32
    %243 = tpu.assume_multiple %242, 8 : i32
    %244 = arith.index_cast %243 : i32 to index
    %c0_63 = arith.constant 0 : index
    %245 = vector.load %arg9[%244, %c0_63] : memref<64x256xf32, #tpu.memory_space<vmem>>, vector<8x256xf32>
    %246 = arith.addf %239, %245 : vector<8x256xf32>
    %247 = vector.broadcast %c6_i32 : i32 to vector<1x64xi32>
    %248 = arith.addi %247, %25 : vector<1x64xi32>
    %249 = vector.broadcast %21 : vector<8x1xi32> to vector<8x64xi32>
    %250 = vector.broadcast %248 : vector<1x64xi32> to vector<8x64xi32>
    %251 = arith.cmpi sgt, %249, %250 : vector<8x64xi32>
    %252 = vector.extract_strided_slice %246 {offsets = [0, 0], sizes = [8, 128], strides = [1, 1]} : vector<8x256xf32> to vector<8x128xf32>
    %253 = arith.negf %252 : vector<8x128xf32>
    %254 = math.exp %253 : vector<8x128xf32>
    %cst_64 = arith.constant 1.000000e+00 : f32
    %255 = vector.broadcast %cst_64 : f32 to vector<8x128xf32>
    %256 = arith.addf %255, %254 : vector<8x128xf32>
    %257 = arith.divf %255, %256 : vector<8x128xf32>
    %258 = vector.extract_strided_slice %257 {offsets = [0, 0], sizes = [8, 64], strides = [1, 1]} : vector<8x128xf32> to vector<8x64xf32>
    %259 = vector.extract_strided_slice %257 {offsets = [0, 64], sizes = [8, 64], strides = [1, 1]} : vector<8x128xf32> to vector<8x64xf32>
    %260 = vector.extract_strided_slice %246 {offsets = [0, 128], sizes = [8, 64], strides = [1, 1]} : vector<8x256xf32> to vector<8x64xf32>
    %261 = vector.extract_strided_slice %246 {offsets = [0, 192], sizes = [8, 64], strides = [1, 1]} : vector<8x256xf32> to vector<8x64xf32>
    %262 = arith.mulf %258, %261 : vector<8x64xf32>
    %263 = arith.addf %260, %262 : vector<8x64xf32>
    %264 = math.tanh %263 : vector<8x64xf32>
    %265 = arith.subf %237, %264 : vector<8x64xf32>
    %266 = arith.mulf %259, %265 : vector<8x64xf32>
    %267 = arith.addf %264, %266 : vector<8x64xf32>
    %268 = arith.select %251, %267, %237 : vector<8x64xi1>, vector<8x64xf32>
    %c7_i32_65 = arith.constant 7 : i32
    %269 = arith.truncf %268 : vector<8x64xf32> to vector<8x64xbf16>
    %cst_66 = arith.constant dense<0.000000e+00> : vector<8x256xf32>
    %270 = tpu.matmul %269, %20, %cst_66 {dimension_numbers = #tpu.dot_dimension_numbers<[1], [0], [0], [1], [0, 0, 1, 1], [], []>} : vector<8x64xbf16>, vector<64x256xbf16>, vector<8x256xf32> -> vector<8x256xf32>
    %c1_i32_67 = arith.constant 1 : i32
    %271 = arith.addi %c7_i32_65, %c1_i32_67 : i32
    %c7_i32_68 = arith.constant 7 : i32
    %272 = arith.minsi %271, %c7_i32_68 : i32
    %c8_i32_69 = arith.constant 8 : i32
    %273 = arith.muli %272, %c8_i32_69 : i32
    %274 = tpu.assume_multiple %273, 8 : i32
    %275 = arith.index_cast %274 : i32 to index
    %c0_70 = arith.constant 0 : index
    %276 = vector.load %arg9[%275, %c0_70] : memref<64x256xf32, #tpu.memory_space<vmem>>, vector<8x256xf32>
    %277 = arith.addf %270, %276 : vector<8x256xf32>
    %278 = vector.broadcast %c7_i32_65 : i32 to vector<1x64xi32>
    %279 = arith.addi %278, %25 : vector<1x64xi32>
    %280 = vector.broadcast %21 : vector<8x1xi32> to vector<8x64xi32>
    %281 = vector.broadcast %279 : vector<1x64xi32> to vector<8x64xi32>
    %282 = arith.cmpi sgt, %280, %281 : vector<8x64xi32>
    %283 = vector.extract_strided_slice %277 {offsets = [0, 0], sizes = [8, 128], strides = [1, 1]} : vector<8x256xf32> to vector<8x128xf32>
    %284 = arith.negf %283 : vector<8x128xf32>
    %285 = math.exp %284 : vector<8x128xf32>
    %cst_71 = arith.constant 1.000000e+00 : f32
    %286 = vector.broadcast %cst_71 : f32 to vector<8x128xf32>
    %287 = arith.addf %286, %285 : vector<8x128xf32>
    %288 = arith.divf %286, %287 : vector<8x128xf32>
    %289 = vector.extract_strided_slice %288 {offsets = [0, 0], sizes = [8, 64], strides = [1, 1]} : vector<8x128xf32> to vector<8x64xf32>
    %290 = vector.extract_strided_slice %288 {offsets = [0, 64], sizes = [8, 64], strides = [1, 1]} : vector<8x128xf32> to vector<8x64xf32>
    %291 = vector.extract_strided_slice %277 {offsets = [0, 128], sizes = [8, 64], strides = [1, 1]} : vector<8x256xf32> to vector<8x64xf32>
    %292 = vector.extract_strided_slice %277 {offsets = [0, 192], sizes = [8, 64], strides = [1, 1]} : vector<8x256xf32> to vector<8x64xf32>
    %293 = arith.mulf %289, %292 : vector<8x64xf32>
    %294 = arith.addf %291, %293 : vector<8x64xf32>
    %295 = math.tanh %294 : vector<8x64xf32>
    %296 = arith.subf %268, %295 : vector<8x64xf32>
    %297 = arith.mulf %290, %296 : vector<8x64xf32>
    %298 = arith.addf %295, %297 : vector<8x64xf32>
    %299 = arith.select %282, %298, %268 : vector<8x64xi1>, vector<8x64xf32>
    %c8_i32_72 = arith.constant 8 : i32
    %c0_73 = arith.constant 0 : index
    %c0_74 = arith.constant 0 : index
    %300 = vector.load %arg8[%c0_73, %c0_74] : memref<8x64xf32, #tpu.memory_space<vmem>>, vector<8x64xf32>
    tpu.vector_store %arg8[%c0_73, %c0_74], %299 {strides = array<i32>} : memref<8x64xf32, #tpu.memory_space<vmem>>, vector<8x64xf32>,
    return
  }
  func.func @transform_0(%arg0: i32) -> (i32, i32, i32) {
    %c0_i32 = arith.constant 0 : i32
    %c0_i32_0 = arith.constant 0 : i32
    %c0_i32_1 = arith.constant 0 : i32
    return %c0_i32, %arg0, %c0_i32_0 : i32, i32, i32
  }
  func.func @transform_1(%arg0: i32) -> (i32, i32) {
    %c0_i32 = arith.constant 0 : i32
    %c0_i32_0 = arith.constant 0 : i32
    %c0_i32_1 = arith.constant 0 : i32
    return %c0_i32, %c0_i32_0 : i32, i32
  }
  func.func @transform_2(%arg0: i32) -> (i32, i32) {
    %c0_i32 = arith.constant 0 : i32
    %c0_i32_0 = arith.constant 0 : i32
    %c0_i32_1 = arith.constant 0 : i32
    return %c0_i32, %c0_i32_0 : i32, i32
  }
  func.func @transform_3(%arg0: i32) -> (i32, i32) {
    %c0_i32 = arith.constant 0 : i32
    %c0_i32_0 = arith.constant 0 : i32
    %c0_i32_1 = arith.constant 0 : i32
    return %c0_i32, %c0_i32_0 : i32, i32
  }
  func.func @transform_4(%arg0: i32) -> (i32, i32) {
    %c0_i32 = arith.constant 0 : i32
    %c0_i32_0 = arith.constant 0 : i32
    %c0_i32_1 = arith.constant 0 : i32
    return %c0_i32, %c0_i32_0 : i32, i32
  }
  func.func @transform_5(%arg0: i32) -> (i32, i32) {
    %c0_i32 = arith.constant 0 : i32
    %c0_i32_0 = arith.constant 0 : i32
    %c0_i32_1 = arith.constant 0 : i32
    return %c0_i32, %c0_i32_0 : i32, i32
  }
  func.func @transform_6(%arg0: i32) -> (i32, i32) {
    %c0_i32 = arith.constant 0 : i32
    %c0_i32_0 = arith.constant 0 : i32
    return %arg0, %c0_i32 : i32, i32
  }
  func.func @transform_7(%arg0: i32) -> (i32, i32) {
    %c0_i32 = arith.constant 0 : i32
    %c0_i32_0 = arith.constant 0 : i32
    return %arg0, %c0_i32 : i32, i32
  }
}

</mosaic_0001>

<llo_original>
// kernel: tpu_custom_call.1
$region0: #{tpu_custom_call.1}
  #allocation0 [shape = 'u32[]', space=smem, size = 0x4, offset = 0x4, fixed_abs, tag = 'smem constant byte address 0x4 - core index']
  #allocation1 [shape = 'u32[144,128]{1,0:T(1,128)}', space=vmem, size = 0x12000, scoped, tag = 'internal scratch']
  #allocation2 [shape = 'f32[64,256]{1,0:T(8,128)}', space=vmem, size = 0x10000, scoped, tag = 'scratch operand']
  %s0 = inlined_call_operand.hbm [shape: f32[8,8,16], index: 0, kind: input, shape index: {}]
  %s1 = inlined_call_operand.vmem [shape: bf16[16,32], index: 1, kind: input, shape index: {}]
  %s2 = inlined_call_operand.vmem [shape: f32[1,32], index: 2, kind: input, shape index: {}]
  %s3 = inlined_call_operand.hbm [shape: bf16[32,256], index: 3, kind: input, shape index: {}]
  %s4 = inlined_call_operand.vmem [shape: f32[1,256], index: 4, kind: input, shape index: {}]
  %s5 = inlined_call_operand.hbm [shape: bf16[64,256], index: 5, kind: input, shape index: {}]
  %s6 = inlined_call_operand.vmem [shape: s32[8,1], index: 6, kind: input, shape index: {}]
  %s7 = inlined_call_operand.hbm [shape: f32[8,64], index: 7, kind: output, shape index: {}]
  %s8 = sld [smem:[#allocation0]]
  $region50: #{tpu_custom_call.1} parent=0
    _
  %s10 = ssub.s32 1, %s8
  %s11 = scalar_select 0, %s10, %s8
  $region1: #{tpu_custom_call.1} parent=0
    #allocation3 [shape = 'u8[32768]{0}', space=vmem, size = 0x8000, scoped, tag = 'input window, operand 0, single buffered']
    #allocation4 [shape = 's32[1]{0}', space=sflag, size = 0x4, scoped, tag = 'scoped memory for tpu_custom_call.1']
    #allocation5 [shape = 's32[1]{0}', space=sflag, size = 0x4, scoped, tag = 'scoped memory for tpu_custom_call.1']
    #allocation6 [shape = 'u8[16384]{0}', space=vmem, size = 0x4000, scoped, tag = 'input window, operand 3, single buffered']
    #allocation7 [shape = 's32[1]{0}', space=sflag, size = 0x4, scoped, tag = 'scoped memory for tpu_custom_call.1']
    #allocation8 [shape = 'u8[32768]{0}', space=vmem, size = 0x8000, scoped, tag = 'input window, operand 5, single buffered']
    #allocation9 [shape = 'u8[4096]{0}', space=vmem, size = 0x1000, scoped, tag = 'output window, operand 0, single buffered']
    %12 = vsyncpa [#allocation4], 0
    %13 = vsyncpa [#allocation7], 0
    %14 = vsyncpa [#allocation5], 0
    // Predicated region
    $region2: #{tpu_custom_call.1} parent=1 // pred_check
      _
    $region3: #{tpu_custom_call.1} parent=1 // pred_check_branch
      %16 = sbr.rel (0) target = $region5
    $region4: #{tpu_custom_call.1} parent=1 // pred_region
      %s18 = ssub.s32 1024, 1024
      %19 = vsyncadd [#allocation4], %s18
      %s20 = sshll.u32 [#allocation3], 4
      %s21 = int_to_ptr.vmem [resolvable:$true] %s20
      %26 = dma.hbm_to_vmem [thread:$0]  %s0, 1024, %s21, [#allocation4], 128, 128, 8
    $region5: #{tpu_custom_call.1} parent=1 // pred_fallthru
      _
    // Predicated region
    $region6: #{tpu_custom_call.1} parent=1 // pred_check
      _
    $region7: #{tpu_custom_call.1} parent=1 // pred_check_branch
      %28 = sbr.rel (0) target = $region9
    $region8: #{tpu_custom_call.1} parent=1 // pred_region
      _
    $region9: #{tpu_custom_call.1} parent=1 // pred_fallthru
      _
    // Predicated region
    $region10: #{tpu_custom_call.1} parent=1 // pred_check
      _
    $region11: #{tpu_custom_call.1} parent=1 // pred_check_branch
      %30 = sbr.rel (0) target = $region13
    $region12: #{tpu_custom_call.1} parent=1 // pred_region
      _
    $region13: #{tpu_custom_call.1} parent=1 // pred_fallthru
      _
    // Predicated region
    $region14: #{tpu_custom_call.1} parent=1 // pred_check
      _
    $region15: #{tpu_custom_call.1} parent=1 // pred_check_branch
      %32 = sbr.rel (0) target = $region17
    $region16: #{tpu_custom_call.1} parent=1 // pred_region
      %s34 = ssub.s32 512, 512
      %35 = vsyncadd [#allocation7], %s34
      %s36 = sshll.u32 [#allocation6], 4
      %s37 = int_to_ptr.vmem [resolvable:$true] %s36
      %42 = dma.hbm_to_vmem [thread:$0]  %s3, 512, %s37, [#allocation7], 128, 128, 8
    $region17: #{tpu_custom_call.1} parent=1 // pred_fallthru
      _
    // Predicated region
    $region18: #{tpu_custom_call.1} parent=1 // pred_check
      _
    $region19: #{tpu_custom_call.1} parent=1 // pred_check_branch
      %44 = sbr.rel (0) target = $region21
    $region20: #{tpu_custom_call.1} parent=1 // pred_region
      _
    $region21: #{tpu_custom_call.1} parent=1 // pred_fallthru
      _
    // Predicated region
    $region22: #{tpu_custom_call.1} parent=1 // pred_check
      _
    $region23: #{tpu_custom_call.1} parent=1 // pred_check_branch
      %46 = sbr.rel (0) target = $region25
    $region24: #{tpu_custom_call.1} parent=1 // pred_region
      %s48 = ssub.s32 1024, 1024
      %49 = vsyncadd [#allocation7], %s48
      %s50 = sshll.u32 [#allocation8], 4
      %s51 = int_to_ptr.vmem [resolvable:$true] %s50
      %56 = dma.hbm_to_vmem [thread:$0]  %s5, 1024, %s51, [#allocation7], 128, 128, 8
    $region25: #{tpu_custom_call.1} parent=1 // pred_fallthru
      _
    // Predicated region
    $region26: #{tpu_custom_call.1} parent=1 // pred_check
      _
    $region27: #{tpu_custom_call.1} parent=1 // pred_check_branch
      %58 = sbr.rel (0) target = $region29
    $region28: #{tpu_custom_call.1} parent=1 // pred_region
      _
    $region29: #{tpu_custom_call.1} parent=1 // pred_fallthru
      _
    // Predicated region
    $region30: #{tpu_custom_call.1} parent=1 // pred_check
      _
    $region31: #{tpu_custom_call.1} parent=1 // pred_check_branch
      %60 = sbr.rel (0) target = $region33
    $region32: #{tpu_custom_call.1} parent=1 // pred_region
      %61 = dma.done [#allocation4], 1024
    $region33: #{tpu_custom_call.1} parent=1 // pred_fallthru
      _
    // Predicated region
    $region34: #{tpu_custom_call.1} parent=1 // pred_check
      _
    $region35: #{tpu_custom_call.1} parent=1 // pred_check_branch
      %63 = sbr.rel (0) target = $region37
    $region36: #{tpu_custom_call.1} parent=1 // pred_region
      %64 = dma.done [#allocation7], 512
    $region37: #{tpu_custom_call.1} parent=1 // pred_fallthru
      _
    // Predicated region
    $region38: #{tpu_custom_call.1} parent=1 // pred_check
      _
    $region39: #{tpu_custom_call.1} parent=1 // pred_check_branch
      %66 = sbr.rel (0) target = $region41
    $region40: #{tpu_custom_call.1} parent=1 // pred_region
      %67 = dma.done [#allocation7], 1024
    $region41: #{tpu_custom_call.1} parent=1 // pred_fallthru
      _
    %v69 = vld [vmem:[#allocation3] sm:$0xff]
    %v70 = vld [vmem:[#allocation3 + $0x8] sm:$0xff]
    %v71 = vld [vmem:[#allocation3 + $0x10] sm:$0xff]
    %v72 = vld [vmem:[#allocation3 + $0x18] sm:$0xff]
    %v73 = vld [vmem:[#allocation3 + $0x20] sm:$0xff]
    %v74 = vld [vmem:[#allocation3 + $0x28] sm:$0xff]
    %v75 = vld [vmem:[#allocation3 + $0x30] sm:$0xff]
    %v76 = vld [vmem:[#allocation3 + $0x38] sm:$0xff]
    %v77 = vpack.c.bf16 %v70, %v69
    %v78 = vpack.c.bf16 %v72, %v71
    %v79 = vpack.c.bf16 %v74, %v73
    %v80 = vpack.c.bf16 %v76, %v75
    %v81 = vld [vmem:[%s1] sm:$0xf]
    %v82 = vld [vmem:[%s1 + $0x4] sm:$0xf]
    %v83 = vld [vmem:[%s2] sm:$0x1]
    %v85 = vlaneseq
    %v86 = vshrl.u32 %v85, 7
    %v87 = vsub.s32 0, %v86
    %v88 = vrot.slane %v83, %v87
    %v92 = vunpack.c.l.b16 %v81
    %v93 = vunpack.c.l.b16 %v82
    %v94 = vpack.c.b16 %v93, %v92
    %vm96 = vcmask 130048
    %v98 = vsel %vm96, %v77, 0
    %v101 = vsel %vm96, %v78, 0
    %v104 = vsel %vm96, %v79, 0
    %v107 = vsel %vm96, %v80, 0
    %109 = vmatprep.subr.bf16.mxu0 0
    %110 = vmatpush1.bf16.msra.mxu0 0
    %111 = vmatprep.subr.bf16.mxu0 0
    %112 = vmatpush1.bf16.msra.mxu0 0
    %113 = vmatprep.subr.bf16.mxu0 0
    %114 = vmatpush1.bf16.msra.mxu0 0
    %115 = vmatprep.subr.bf16.mxu0 0
    %116 = vmatpush1.bf16.msra.mxu0 0
    %117 = vmatprep.subr.bf16.mxu0 0
    %118 = vmatpush1.bf16.msra.mxu0 0
    %119 = vmatprep.subr.bf16.mxu0 0
    %120 = vmatpush1.bf16.msra.mxu0 0
    %121 = vmatprep.subr.bf16.mxu0 0
    %122 = vmatpush1.bf16.msra.mxu0 0
    %123 = vmatprep.subr.bf16.mxu0 0
    %124 = vmatpush1.bf16.msra.mxu0 %v94
    %125 = vmatprep.subr.bf16.mxu0 0
    %126 = vmatpush2.bf16.msra.mxu0 0
    %127 = vmatprep.subr.bf16.mxu0 0
    %128 = vmatpush2.bf16.msra.mxu0 0
    %129 = vmatprep.subr.bf16.mxu0 0
    %130 = vmatpush2.bf16.msra.mxu0 0
    %131 = vmatprep.subr.bf16.mxu0 0
    %132 = vmatpush2.bf16.msra.mxu0 0
    %133 = vmatprep.subr.bf16.mxu0 0
    %134 = vmatpush2.bf16.msra.mxu0 0
    %135 = vmatprep.subr.bf16.mxu0 0
    %136 = vmatpush2.bf16.msra.mxu0 0
    %137 = vmatprep.subr.bf16.mxu0 0
    %138 = vmatpush2.bf16.msra.mxu0 0
    %139 = vmatprep.subr.bf16.mxu0 0
    %140 = vmatpush2.bf16.msra.mxu0 0
    %141 = vmatprep.mubr.bf16.mxu0 0
    %142 = vmatmul.mubr.bf16.gmra.mxu0 %v98
    %v143 = vpop.f32.mrf.mxu0
    %v144 = vadd.f32 %v88, %v143
    %v145 = vpop.f32.mrf.mxu0
    %v146 = vpop.f32.mrf.mxu0
    %v147 = vadd.f32 %v88, %v146
    %v148 = vpop.f32.mrf.mxu0
    %149 = vmatprep.mubr.bf16.mxu0 0
    %150 = vmatmul.mubr.bf16.gmra.mxu0 %v101
    %v151 = vpop.f32.mrf.mxu0
    %v152 = vadd.f32 %v88, %v151
    %v153 = vpop.f32.mrf.mxu0
    %v154 = vpop.f32.mrf.mxu0
    %v155 = vadd.f32 %v88, %v154
    %v156 = vpop.f32.mrf.mxu0
    %157 = vmatprep.mubr.bf16.mxu0 0
    %158 = vmatmul.mubr.bf16.gmra.mxu0 %v104
    %v159 = vpop.f32.mrf.mxu0
    %v160 = vadd.f32 %v88, %v159
    %v161 = vpop.f32.mrf.mxu0
    %v162 = vpop.f32.mrf.mxu0
    %v163 = vadd.f32 %v88, %v162
    %v164 = vpop.f32.mrf.mxu0
    %165 = vmatprep.mubr.bf16.mxu0 0
    %166 = vmatmul.mubr.bf16.gmra.mxu0 %v107
    %v167 = vpop.f32.mrf.mxu0
    %v168 = vadd.f32 %v88, %v167
    %v169 = vpop.f32.mrf.mxu0
    %v170 = vpop.f32.mrf.mxu0
    %v171 = vadd.f32 %v88, %v170
    %v172 = vpop.f32.mrf.mxu0
    %173 = vdwg.mxu0
    %vm174 = vcmp.gt.f32.partialorder %v144, 0.0
    %vm175 = vcmp.gt.f32.partialorder %v147, 0.0
    %vm176 = vcmp.gt.f32.partialorder %v152, 0.0
    %vm177 = vcmp.gt.f32.partialorder %v155, 0.0
    %vm178 = vcmp.gt.f32.partialorder %v160, 0.0
    %vm179 = vcmp.gt.f32.partialorder %v163, 0.0
    %vm180 = vcmp.gt.f32.partialorder %v168, 0.0
    %vm181 = vcmp.gt.f32.partialorder %v171, 0.0
    %v182 = vmul.f32 %v144, 0.01
    %v183 = vmul.f32 %v147, 0.01
    %v184 = vmul.f32 %v152, 0.01
    %v185 = vmul.f32 %v155, 0.01
    %v186 = vmul.f32 %v160, 0.01
    %v187 = vmul.f32 %v163, 0.01
    %v188 = vmul.f32 %v168, 0.01
    %v189 = vmul.f32 %v171, 0.01
    %v190 = vsel %vm174, %v144, %v182
    %v191 = vsel %vm175, %v147, %v183
    %v192 = vsel %vm176, %v152, %v184
    %v193 = vsel %vm177, %v155, %v185
    %v194 = vsel %vm178, %v160, %v186
    %v195 = vsel %vm179, %v163, %v187
    %v196 = vsel %vm180, %v168, %v188
    %v197 = vsel %vm181, %v171, %v189
    %v198 = vpack.c.bf16 %v191, %v190
    %v199 = vpack.c.bf16 %v193, %v192
    %v200 = vpack.c.bf16 %v195, %v194
    %v201 = vpack.c.bf16 %v197, %v196
    %v202 = vld [vmem:[#allocation6] sm:$0xff]
    %v203 = vld [vmem:[#allocation6 + $0x8] sm:$0xff]
    %v204 = vld [vmem:[#allocation6 + $0x10] sm:$0xff]
    %v205 = vld [vmem:[#allocation6 + $0x18] sm:$0xff]
    %v206 = vld [vmem:[%s4] sm:$0x3]
    %v208 = vlaneseq
    %v209 = vshrl.u32 %v208, 7
    %v210 = vsub.s32 0, %v209
    %v211 = vrot.slane %v206, %v210
    %v212 = vlaneseq
    %v213 = vshrl.u32 %v212, 7
    %v214 = vsub.s32 1, %v213
    %v215 = vrot.slane %v206, %v214
    %v222 = vunpack.c.l.b16 %v202
    %v223 = vunpack.c.h.b16 %v202
    %v224 = vunpack.c.l.b16 %v203
    %v225 = vunpack.c.h.b16 %v203
    %v226 = vunpack.c.l.b16 %v204
    %v227 = vunpack.c.h.b16 %v204
    %v228 = vunpack.c.l.b16 %v205
    %v229 = vunpack.c.h.b16 %v205
    %v230 = vpack.c.b16 %v224, %v222
    %v231 = vpack.c.b16 %v225, %v223
    %v232 = vpack.c.b16 %v228, %v226
    %v233 = vpack.c.b16 %v229, %v227
    %vm238 = vcmask 261120
    %v240 = vsel %vm238, %v198, 0
    %v243 = vsel %vm238, %v199, 0
    %v246 = vsel %vm238, %v200, 0
    %v249 = vsel %vm238, %v201, 0
    %251 = vmatprep.subr.bf16.mxu0 0
    %252 = vmatpush1.bf16.msra.mxu0 0
    %253 = vmatprep.subr.bf16.mxu0 0
    %254 = vmatpush1.bf16.msra.mxu0 0
    %255 = vmatprep.subr.bf16.mxu0 0
    %256 = vmatpush1.bf16.msra.mxu0 0
    %257 = vmatprep.subr.bf16.mxu0 0
    %258 = vmatpush1.bf16.msra.mxu0 0
    %259 = vmatprep.subr.bf16.mxu0 0
    %260 = vmatpush1.bf16.msra.mxu0 0
    %261 = vmatprep.subr.bf16.mxu0 0
    %262 = vmatpush1.bf16.msra.mxu0 0
    %263 = vmatprep.subr.bf16.mxu0 %v233
    %264 = vmatpush1.bf16.msra.mxu0 %v232
    %265 = vmatprep.subr.bf16.mxu0 %v231
    %266 = vmatpush1.bf16.msra.mxu0 %v230
    %267 = vmatprep.subr.bf16.mxu0 0
    %268 = vmatpush2.bf16.msra.mxu0 0
    %269 = vmatprep.subr.bf16.mxu0 0
    %270 = vmatpush2.bf16.msra.mxu0 0
    %271 = vmatprep.subr.bf16.mxu0 0
    %272 = vmatpush2.bf16.msra.mxu0 0
    %273 = vmatprep.subr.bf16.mxu0 0
    %274 = vmatpush2.bf16.msra.mxu0 0
    %275 = vmatprep.subr.bf16.mxu0 0
    %276 = vmatpush2.bf16.msra.mxu0 0
    %277 = vmatprep.subr.bf16.mxu0 0
    %278 = vmatpush2.bf16.msra.mxu0 0
    %279 = vmatprep.subr.bf16.mxu0 0
    %280 = vmatpush2.bf16.msra.mxu0 0
    %281 = vmatprep.subr.bf16.mxu0 0
    %282 = vmatpush2.bf16.msra.mxu0 0
    %283 = vmatprep.mubr.bf16.mxu0 0
    %284 = vmatmul.mubr.bf16.gmra.mxu0 %v240
    %v285 = vpop.f32.mrf.mxu0
    %v286 = vadd.f32 %v211, %v285
    %v287 = vpop.f32.mrf.mxu0
    %v288 = vadd.f32 %v215, %v287
    %v289 = vpop.f32.mrf.mxu0
    %v290 = vadd.f32 %v211, %v289
    %v291 = vpop.f32.mrf.mxu0
    %v292 = vadd.f32 %v215, %v291
    %293 = vmatprep.mubr.bf16.mxu0 0
    %294 = vmatmul.mubr.bf16.gmra.mxu0 %v243
    %v295 = vpop.f32.mrf.mxu0
    %v296 = vadd.f32 %v211, %v295
    %v297 = vpop.f32.mrf.mxu0
    %v298 = vadd.f32 %v215, %v297
    %v299 = vpop.f32.mrf.mxu0
    %v300 = vadd.f32 %v211, %v299
    %v301 = vpop.f32.mrf.mxu0
    %v302 = vadd.f32 %v215, %v301
    %303 = vmatprep.mubr.bf16.mxu0 0
    %304 = vmatmul.mubr.bf16.gmra.mxu0 %v246
    %v305 = vpop.f32.mrf.mxu0
    %v306 = vadd.f32 %v211, %v305
    %v307 = vpop.f32.mrf.mxu0
    %v308 = vadd.f32 %v215, %v307
    %v309 = vpop.f32.mrf.mxu0
    %v310 = vadd.f32 %v211, %v309
    %v311 = vpop.f32.mrf.mxu0
    %v312 = vadd.f32 %v215, %v311
    %313 = vmatprep.mubr.bf16.mxu0 0
    %314 = vmatmul.mubr.bf16.gmra.mxu0 %v249
    %v315 = vpop.f32.mrf.mxu0
    %v316 = vadd.f32 %v211, %v315
    %v317 = vpop.f32.mrf.mxu0
    %v318 = vadd.f32 %v215, %v317
    %v319 = vpop.f32.mrf.mxu0
    %v320 = vadd.f32 %v211, %v319
    %v321 = vpop.f32.mrf.mxu0
    %v322 = vadd.f32 %v215, %v321
    %323 = vdwg.mxu0
    %324 = vst [vmem:[#allocation2] sm:$0xff] %v286
    %325 = vst [vmem:[#allocation2 + $0x8] sm:$0xff] %v288
    %326 = vst [vmem:[#allocation2 + $0x10] sm:$0xff] %v290
    %327 = vst [vmem:[#allocation2 + $0x18] sm:$0xff] %v292
    %328 = vst [vmem:[#allocation2 + $0x20] sm:$0xff] %v296
    %329 = vst [vmem:[#allocation2 + $0x28] sm:$0xff] %v298
    %330 = vst [vmem:[#allocation2 + $0x30] sm:$0xff] %v300
    %331 = vst [vmem:[#allocation2 + $0x38] sm:$0xff] %v302
    %332 = vst [vmem:[#allocation2 + $0x40] sm:$0xff] %v306
    %333 = vst [vmem:[#allocation2 + $0x48] sm:$0xff] %v308
    %334 = vst [vmem:[#allocation2 + $0x50] sm:$0xff] %v310
    %335 = vst [vmem:[#allocation2 + $0x58] sm:$0xff] %v312
    %336 = vst [vmem:[#allocation2 + $0x60] sm:$0xff] %v316
    %337 = vst [vmem:[#allocation2 + $0x68] sm:$0xff] %v318
    %338 = vst [vmem:[#allocation2 + $0x70] sm:$0xff] %v320
    %339 = vst [vmem:[#allocation2 + $0x78] sm:$0xff] %v322
    %v340 = vld [vmem:[#allocation8] sm:$0xff]
    %v341 = vld [vmem:[#allocation8 + $0x8] sm:$0xff]
    %v342 = vld [vmem:[#allocation8 + $0x10] sm:$0xff]
    %v343 = vld [vmem:[#allocation8 + $0x18] sm:$0xff]
    %v344 = vld [vmem:[#allocation8 + $0x20] sm:$0xff]
    %v345 = vld [vmem:[#allocation8 + $0x28] sm:$0xff]
    %v346 = vld [vmem:[#allocation8 + $0x30] sm:$0xff]
    %v347 = vld [vmem:[#allocation8 + $0x38] sm:$0xff]
    %v348 = vld [vmem:[%s6] sm:$0xff]
    %v349 = vlaneseq
    %v350 = vand.u32 %v349, 127
    %vm351 = vcmp.lt.s32.totalorder %v350, 32
    %v352 = vsel %vm351, 1, 0
    %vm353 = vcmp.gt.s32.totalorder %v348, 0
    %vm354 = vcmp.gt.s32.totalorder %v352, 0
    %v355 = vsel %vm353, 1, 0
    %356 = vset.pattern.permute.xlu0 0
    %357 = vperm.xlu0 %356, %v355
    %v358 = vpop.permute.xlu0 %357
    %vm359 = vcmp.eq.s32.totalorder %v358, 1
    %v360 = vsel %vm354, 1, 0
    %vm361 = vcmp.eq.s32.totalorder %v360, 1
    %vm362 = vmand %vm359, %vm361
    %v363 = vld [vmem:[#allocation2] sm:$0xff]
    %v364 = vld [vmem:[#allocation2 + $0x8] sm:$0xff]
    %v365 = vxor.u32 %v363, 2147483648
    %v366 = vmul.f32 %v365, 1.442695
    %v367 = vpow.pop %v366
    %v368 = vadd.f32 %v367, 1.0
    %v369 = vrcp.pop %v368
    %v370 = vmul.f32 1.0, %v369
    %372 = vrot.lane.b32.xlu0 %v364, 64
    %v373 = vpop.permute.xlu0 %372
    %v375 = vmul.f32 %v370, %v373
    %v376 = vadd.f32 %v364, %v375
    %v377 = vtanh.pop %v376
    %v378 = vsub.f32 0.0, %v377
    %380 = vrot.lane.b32.xlu0 %v378, 64
    %v381 = vpop.permute.xlu0 %380
    %v383 = vmul.f32 %v370, %v381
    %385 = vrot.lane.b32.xlu0 %v383, 64
    %v386 = vpop.permute.xlu0 %385
    %v388 = vadd.f32 %v377, %v386
    %v389 = vsel %vm362, %v388, 0.0
    %v390 = vpack.c.bf16 %v389, %v389
    %s391 = smul.u32 1, 2
    %s392 = smul.addr %s391, 8
    %s393 = scalar_lea.vmem [#allocation2], %s392
    %v394 = vld [vmem:[%s393] sm:$0xff]
    %v395 = vld [vmem:[%s393 + $0x8] sm:$0xff]
    %v404 = vunpack.c.l.b16 %v340
    %v405 = vunpack.c.h.b16 %v340
    %v406 = vunpack.c.l.b16 %v341
    %v407 = vunpack.c.h.b16 %v341
    %v408 = vunpack.c.l.b16 %v342
    %v409 = vunpack.c.h.b16 %v342
    %v410 = vunpack.c.l.b16 %v343
    %v411 = vunpack.c.h.b16 %v343
    %v412 = vunpack.c.l.b16 %v344
    %v413 = vunpack.c.h.b16 %v344
    %v414 = vunpack.c.l.b16 %v345
    %v415 = vunpack.c.h.b16 %v345
    %v416 = vunpack.c.l.b16 %v346
    %v417 = vunpack.c.h.b16 %v346
    %v418 = vunpack.c.l.b16 %v347
    %v419 = vunpack.c.h.b16 %v347
    %v420 = vpack.c.b16 %v406, %v404
    %v421 = vpack.c.b16 %v407, %v405
    %v422 = vpack.c.b16 %v410, %v408
    %v423 = vpack.c.b16 %v411, %v409
    %v424 = vpack.c.b16 %v414, %v412
    %v425 = vpack.c.b16 %v415, %v413
    %v426 = vpack.c.b16 %v418, %v416
    %v427 = vpack.c.b16 %v419, %v417
    %vm436 = vcmask 523264
    %v438 = vsel %vm436, %v390, 0
    %440 = vmatprep.subr.bf16.mxu0 0
    %441 = vmatpush1.bf16.msra.mxu0 0
    %442 = vmatprep.subr.bf16.mxu0 0
    %443 = vmatpush1.bf16.msra.mxu0 0
    %444 = vmatprep.subr.bf16.mxu0 0
    %445 = vmatpush1.bf16.msra.mxu0 0
    %446 = vmatprep.subr.bf16.mxu0 0
    %447 = vmatpush1.bf16.msra.mxu0 0
    %448 = vmatprep.subr.bf16.mxu0 %v427
    %449 = vmatpush1.bf16.msra.mxu0 %v426
    %450 = vmatprep.subr.bf16.mxu0 %v425
    %451 = vmatpush1.bf16.msra.mxu0 %v424
    %452 = vmatprep.subr.bf16.mxu0 %v423
    %453 = vmatpush1.bf16.msra.mxu0 %v422
    %454 = vmatprep.subr.bf16.mxu0 %v421
    %455 = vmatpush1.bf16.msra.mxu0 %v420
    %456 = vmatprep.subr.bf16.mxu0 0
    %457 = vmatpush2.bf16.msra.mxu0 0
    %458 = vmatprep.subr.bf16.mxu0 0
    %459 = vmatpush2.bf16.msra.mxu0 0
    %460 = vmatprep.subr.bf16.mxu0 0
    %461 = vmatpush2.bf16.msra.mxu0 0
    %462 = vmatprep.subr.bf16.mxu0 0
    %463 = vmatpush2.bf16.msra.mxu0 0
    %464 = vmatprep.subr.bf16.mxu0 0
    %465 = vmatpush2.bf16.msra.mxu0 0
    %466 = vmatprep.subr.bf16.mxu0 0
    %467 = vmatpush2.bf16.msra.mxu0 0
    %468 = vmatprep.subr.bf16.mxu0 0
    %469 = vmatpush2.bf16.msra.mxu0 0
    %470 = vmatprep.subr.bf16.mxu0 0
    %471 = vmatpush2.bf16.msra.mxu0 0
    %472 = vmatprep.mubr.bf16.mxu0 0
    %473 = vmatmul.mubr.bf16.gmra.mxu0 %v438
    %v474 = vpop.f32.mrf.mxu0
    %v475 = vadd.f32 %v394, %v474
    %v476 = vpop.f32.mrf.mxu0
    %v477 = vadd.f32 %v395, %v476
    %v478 = vpop.f32.mrf.mxu0
    %v479 = vpop.f32.mrf.mxu0
    %480 = vdwg.mxu0
    %481 = vset.pattern.permute.xlu0 0
    %482 = vperm.xlu0 %481, %v348
    %v483 = vpop.permute.xlu0 %482
    %vm484 = vcmp.gt.s32.totalorder %v483, %v352
    %v485 = vxor.u32 %v475, 2147483648
    %v486 = vmul.f32 %v485, 1.442695
    %v487 = vpow.pop %v486
    %v488 = vadd.f32 %v487, 1.0
    %v489 = vrcp.pop %v488
    %v490 = vmul.f32 1.0, %v489
    %492 = vrot.lane.b32.xlu0 %v477, 64
    %v493 = vpop.permute.xlu0 %492
    %v495 = vmul.f32 %v490, %v493
    %v496 = vadd.f32 %v477, %v495
    %v497 = vtanh.pop %v496
    %v498 = vsub.f32 %v389, %v497
    %500 = vrot.lane.b32.xlu0 %v498, 64
    %v501 = vpop.permute.xlu0 %500
    %v503 = vmul.f32 %v490, %v501
    %505 = vrot.lane.b32.xlu0 %v503, 64
    %v506 = vpop.permute.xlu0 %505
    %v508 = vadd.f32 %v497, %v506
    %v509 = vsel %vm484, %v508, %v389
    %v510 = vpack.c.bf16 %v509, %v509
    %s511 = smul.u32 2, 2
    %s512 = smul.addr %s511, 8
    %s513 = scalar_lea.vmem [#allocation2], %s512
    %v514 = vld [vmem:[%s513] sm:$0xff]
    %v515 = vld [vmem:[%s513 + $0x8] sm:$0xff]
    %v517 = vsel %vm436, %v510, 0
    %519 = vmatprep.subr.bf16.mxu0 0
    %520 = vmatpush1.bf16.msra.mxu0 0
    %521 = vmatprep.subr.bf16.mxu0 0
    %522 = vmatpush1.bf16.msra.mxu0 0
    %523 = vmatprep.subr.bf16.mxu0 0
    %524 = vmatpush1.bf16.msra.mxu0 0
    %525 = vmatprep.subr.bf16.mxu0 0
    %526 = vmatpush1.bf16.msra.mxu0 0
    %527 = vmatprep.subr.bf16.mxu0 %v427
    %528 = vmatpush1.bf16.msra.mxu0 %v426
    %529 = vmatprep.subr.bf16.mxu0 %v425
    %530 = vmatpush1.bf16.msra.mxu0 %v424
    %531 = vmatprep.subr.bf16.mxu0 %v423
    %532 = vmatpush1.bf16.msra.mxu0 %v422
    %533 = vmatprep.subr.bf16.mxu0 %v421
    %534 = vmatpush1.bf16.msra.mxu0 %v420
    %535 = vmatprep.subr.bf16.mxu0 0
    %536 = vmatpush2.bf16.msra.mxu0 0
    %537 = vmatprep.subr.bf16.mxu0 0
    %538 = vmatpush2.bf16.msra.mxu0 0
    %539 = vmatprep.subr.bf16.mxu0 0
    %540 = vmatpush2.bf16.msra.mxu0 0
    %541 = vmatprep.subr.bf16.mxu0 0
    %542 = vmatpush2.bf16.msra.mxu0 0
    %543 = vmatprep.subr.bf16.mxu0 0
    %544 = vmatpush2.bf16.msra.mxu0 0
    %545 = vmatprep.subr.bf16.mxu0 0
    %546 = vmatpush2.bf16.msra.mxu0 0
    %547 = vmatprep.subr.bf16.mxu0 0
    %548 = vmatpush2.bf16.msra.mxu0 0
    %549 = vmatprep.subr.bf16.mxu0 0
    %550 = vmatpush2.bf16.msra.mxu0 0
    %551 = vmatprep.mubr.bf16.mxu0 0
    %552 = vmatmul.mubr.bf16.gmra.mxu0 %v517
    %v553 = vpop.f32.mrf.mxu0
    %v554 = vadd.f32 %v514, %v553
    %v555 = vpop.f32.mrf.mxu0
    %v556 = vadd.f32 %v515, %v555
    %v557 = vpop.f32.mrf.mxu0
    %v558 = vpop.f32.mrf.mxu0
    %559 = vdwg.mxu0
    %v560 = vadd.s32 %v352, 1
    %vm561 = vcmp.gt.s32.totalorder %v483, %v560
    %v562 = vxor.u32 %v554, 2147483648
    %v563 = vmul.f32 %v562, 1.442695
    %v564 = vpow.pop %v563
    %v565 = vadd.f32 %v564, 1.0
    %v566 = vrcp.pop %v565
    %v567 = vmul.f32 1.0, %v566
    %569 = vrot.lane.b32.xlu0 %v556, 64
    %v570 = vpop.permute.xlu0 %569
    %v572 = vmul.f32 %v567, %v570
    %v573 = vadd.f32 %v556, %v572
    %v574 = vtanh.pop %v573
    %v575 = vsub.f32 %v509, %v574
    %577 = vrot.lane.b32.xlu0 %v575, 64
    %v578 = vpop.permute.xlu0 %577
    %v580 = vmul.f32 %v567, %v578
    %582 = vrot.lane.b32.xlu0 %v580, 64
    %v583 = vpop.permute.xlu0 %582
    %v585 = vadd.f32 %v574, %v583
    %v586 = vsel %vm561, %v585, %v509
    %v587 = vpack.c.bf16 %v586, %v586
    %s588 = smul.u32 3, 2
    %s589 = smul.addr %s588, 8
    %s590 = scalar_lea.vmem [#allocation2], %s589
    %v591 = vld [vmem:[%s590] sm:$0xff]
    %v592 = vld [vmem:[%s590 + $0x8] sm:$0xff]
    %v594 = vsel %vm436, %v587, 0
    %596 = vmatprep.subr.bf16.mxu0 0
    %597 = vmatpush1.bf16.msra.mxu0 0
    %598 = vmatprep.subr.bf16.mxu0 0
    %599 = vmatpush1.bf16.msra.mxu0 0
    %600 = vmatprep.subr.bf16.mxu0 0
    %601 = vmatpush1.bf16.msra.mxu0 0
    %602 = vmatprep.subr.bf16.mxu0 0
    %603 = vmatpush1.bf16.msra.mxu0 0
    %604 = vmatprep.subr.bf16.mxu0 %v427
    %605 = vmatpush1.bf16.msra.mxu0 %v426
    %606 = vmatprep.subr.bf16.mxu0 %v425
    %607 = vmatpush1.bf16.msra.mxu0 %v424
    %608 = vmatprep.subr.bf16.mxu0 %v423
    %609 = vmatpush1.bf16.msra.mxu0 %v422
    %610 = vmatprep.subr.bf16.mxu0 %v421
    %611 = vmatpush1.bf16.msra.mxu0 %v420
    %612 = vmatprep.subr.bf16.mxu0 0
    %613 = vmatpush2.bf16.msra.mxu0 0
    %614 = vmatprep.subr.bf16.mxu0 0
    %615 = vmatpush2.bf16.msra.mxu0 0
    %616 = vmatprep.subr.bf16.mxu0 0
    %617 = vmatpush2.bf16.msra.mxu0 0
    %618 = vmatprep.subr.bf16.mxu0 0
    %619 = vmatpush2.bf16.msra.mxu0 0
    %620 = vmatprep.subr.bf16.mxu0 0
    %621 = vmatpush2.bf16.msra.mxu0 0
    %622 = vmatprep.subr.bf16.mxu0 0
    %623 = vmatpush2.bf16.msra.mxu0 0
    %624 = vmatprep.subr.bf16.mxu0 0
    %625 = vmatpush2.bf16.msra.mxu0 0
    %626 = vmatprep.subr.bf16.mxu0 0
    %627 = vmatpush2.bf16.msra.mxu0 0
    %628 = vmatprep.mubr.bf16.mxu0 0
    %629 = vmatmul.mubr.bf16.gmra.mxu0 %v594
    %v630 = vpop.f32.mrf.mxu0
    %v631 = vadd.f32 %v591, %v630
    %v632 = vpop.f32.mrf.mxu0
    %v633 = vadd.f32 %v592, %v632
    %v634 = vpop.f32.mrf.mxu0
    %v635 = vpop.f32.mrf.mxu0
    %636 = vdwg.mxu0
    %v637 = vadd.s32 %v352, 2
    %vm638 = vcmp.gt.s32.totalorder %v483, %v637
    %v639 = vxor.u32 %v631, 2147483648
    %v640 = vmul.f32 %v639, 1.442695
    %v641 = vpow.pop %v640
    %v642 = vadd.f32 %v641, 1.0
    %v643 = vrcp.pop %v642
    %v644 = vmul.f32 1.0, %v643
    %646 = vrot.lane.b32.xlu0 %v633, 64
    %v647 = vpop.permute.xlu0 %646
    %v649 = vmul.f32 %v644, %v647
    %v650 = vadd.f32 %v633, %v649
    %v651 = vtanh.pop %v650
    %v652 = vsub.f32 %v586, %v651
    %654 = vrot.lane.b32.xlu0 %v652, 64
    %v655 = vpop.permute.xlu0 %654
    %v657 = vmul.f32 %v644, %v655
    %659 = vrot.lane.b32.xlu0 %v657, 64
    %v660 = vpop.permute.xlu0 %659
    %v662 = vadd.f32 %v651, %v660
    %v663 = vsel %vm638, %v662, %v586
    %v664 = vpack.c.bf16 %v663, %v663
    %s665 = smul.u32 4, 2
    %s666 = smul.addr %s665, 8
    %s667 = scalar_lea.vmem [#allocation2], %s666
    %v668 = vld [vmem:[%s667] sm:$0xff]
    %v669 = vld [vmem:[%s667 + $0x8] sm:$0xff]
    %v671 = vsel %vm436, %v664, 0
    %673 = vmatprep.subr.bf16.mxu0 0
    %674 = vmatpush1.bf16.msra.mxu0 0
    %675 = vmatprep.subr.bf16.mxu0 0
    %676 = vmatpush1.bf16.msra.mxu0 0
    %677 = vmatprep.subr.bf16.mxu0 0
    %678 = vmatpush1.bf16.msra.mxu0 0
    %679 = vmatprep.subr.bf16.mxu0 0
    %680 = vmatpush1.bf16.msra.mxu0 0
    %681 = vmatprep.subr.bf16.mxu0 %v427
    %682 = vmatpush1.bf16.msra.mxu0 %v426
    %683 = vmatprep.subr.bf16.mxu0 %v425
    %684 = vmatpush1.bf16.msra.mxu0 %v424
    %685 = vmatprep.subr.bf16.mxu0 %v423
    %686 = vmatpush1.bf16.msra.mxu0 %v422
    %687 = vmatprep.subr.bf16.mxu0 %v421
    %688 = vmatpush1.bf16.msra.mxu0 %v420
    %689 = vmatprep.subr.bf16.mxu0 0
    %690 = vmatpush2.bf16.msra.mxu0 0
    %691 = vmatprep.subr.bf16.mxu0 0
    %692 = vmatpush2.bf16.msra.mxu0 0
    %693 = vmatprep.subr.bf16.mxu0 0
    %694 = vmatpush2.bf16.msra.mxu0 0
    %695 = vmatprep.subr.bf16.mxu0 0
    %696 = vmatpush2.bf16.msra.mxu0 0
    %697 = vmatprep.subr.bf16.mxu0 0
    %698 = vmatpush2.bf16.msra.mxu0 0
    %699 = vmatprep.subr.bf16.mxu0 0
    %700 = vmatpush2.bf16.msra.mxu0 0
    %701 = vmatprep.subr.bf16.mxu0 0
    %702 = vmatpush2.bf16.msra.mxu0 0
    %703 = vmatprep.subr.bf16.mxu0 0
    %704 = vmatpush2.bf16.msra.mxu0 0
    %705 = vmatprep.mubr.bf16.mxu0 0
    %706 = vmatmul.mubr.bf16.gmra.mxu0 %v671
    %v707 = vpop.f32.mrf.mxu0
    %v708 = vadd.f32 %v668, %v707
    %v709 = vpop.f32.mrf.mxu0
    %v710 = vadd.f32 %v669, %v709
    %v711 = vpop.f32.mrf.mxu0
    %v712 = vpop.f32.mrf.mxu0
    %713 = vdwg.mxu0
    %v714 = vadd.s32 %v352, 3
    %vm715 = vcmp.gt.s32.totalorder %v483, %v714
    %v716 = vxor.u32 %v708, 2147483648
    %v717 = vmul.f32 %v716, 1.442695
    %v718 = vpow.pop %v717
    %v719 = vadd.f32 %v718, 1.0
    %v720 = vrcp.pop %v719
    %v721 = vmul.f32 1.0, %v720
    %723 = vrot.lane.b32.xlu0 %v710, 64
    %v724 = vpop.permute.xlu0 %723
    %v726 = vmul.f32 %v721, %v724
    %v727 = vadd.f32 %v710, %v726
    %v728 = vtanh.pop %v727
    %v729 = vsub.f32 %v663, %v728
    %731 = vrot.lane.b32.xlu0 %v729, 64
    %v732 = vpop.permute.xlu0 %731
    %v734 = vmul.f32 %v721, %v732
    %736 = vrot.lane.b32.xlu0 %v734, 64
    %v737 = vpop.permute.xlu0 %736
    %v739 = vadd.f32 %v728, %v737
    %v740 = vsel %vm715, %v739, %v663
    %v741 = vpack.c.bf16 %v740, %v740
    %s742 = smul.u32 5, 2
    %s743 = smul.addr %s742, 8
    %s744 = scalar_lea.vmem [#allocation2], %s743
    %v745 = vld [vmem:[%s744] sm:$0xff]
    %v746 = vld [vmem:[%s744 + $0x8] sm:$0xff]
    %v748 = vsel %vm436, %v741, 0
    %750 = vmatprep.subr.bf16.mxu0 0
    %751 = vmatpush1.bf16.msra.mxu0 0
    %752 = vmatprep.subr.bf16.mxu0 0
    %753 = vmatpush1.bf16.msra.mxu0 0
    %754 = vmatprep.subr.bf16.mxu0 0
    %755 = vmatpush1.bf16.msra.mxu0 0
    %756 = vmatprep.subr.bf16.mxu0 0
    %757 = vmatpush1.bf16.msra.mxu0 0
    %758 = vmatprep.subr.bf16.mxu0 %v427
    %759 = vmatpush1.bf16.msra.mxu0 %v426
    %760 = vmatprep.subr.bf16.mxu0 %v425
    %761 = vmatpush1.bf16.msra.mxu0 %v424
    %762 = vmatprep.subr.bf16.mxu0 %v423
    %763 = vmatpush1.bf16.msra.mxu0 %v422
    %764 = vmatprep.subr.bf16.mxu0 %v421
    %765 = vmatpush1.bf16.msra.mxu0 %v420
    %766 = vmatprep.subr.bf16.mxu0 0
    %767 = vmatpush2.bf16.msra.mxu0 0
    %768 = vmatprep.subr.bf16.mxu0 0
    %769 = vmatpush2.bf16.msra.mxu0 0
    %770 = vmatprep.subr.bf16.mxu0 0
    %771 = vmatpush2.bf16.msra.mxu0 0
    %772 = vmatprep.subr.bf16.mxu0 0
    %773 = vmatpush2.bf16.msra.mxu0 0
    %774 = vmatprep.subr.bf16.mxu0 0
    %775 = vmatpush2.bf16.msra.mxu0 0
    %776 = vmatprep.subr.bf16.mxu0 0
    %777 = vmatpush2.bf16.msra.mxu0 0
    %778 = vmatprep.subr.bf16.mxu0 0
    %779 = vmatpush2.bf16.msra.mxu0 0
    %780 = vmatprep.subr.bf16.mxu0 0
    %781 = vmatpush2.bf16.msra.mxu0 0
    %782 = vmatprep.mubr.bf16.mxu0 0
    %783 = vmatmul.mubr.bf16.gmra.mxu0 %v748
    %v784 = vpop.f32.mrf.mxu0
    %v785 = vadd.f32 %v745, %v784
    %v786 = vpop.f32.mrf.mxu0
    %v787 = vadd.f32 %v746, %v786
    %v788 = vpop.f32.mrf.mxu0
    %v789 = vpop.f32.mrf.mxu0
    %790 = vdwg.mxu0
    %v791 = vadd.s32 %v352, 4
    %vm792 = vcmp.gt.s32.totalorder %v483, %v791
    %v793 = vxor.u32 %v785, 2147483648
    %v794 = vmul.f32 %v793, 1.442695
    %v795 = vpow.pop %v794
    %v796 = vadd.f32 %v795, 1.0
    %v797 = vrcp.pop %v796
    %v798 = vmul.f32 1.0, %v797
    %800 = vrot.lane.b32.xlu0 %v787, 64
    %v801 = vpop.permute.xlu0 %800
    %v803 = vmul.f32 %v798, %v801
    %v804 = vadd.f32 %v787, %v803
    %v805 = vtanh.pop %v804
    %v806 = vsub.f32 %v740, %v805
    %808 = vrot.lane.b32.xlu0 %v806, 64
    %v809 = vpop.permute.xlu0 %808
    %v811 = vmul.f32 %v798, %v809
    %813 = vrot.lane.b32.xlu0 %v811, 64
    %v814 = vpop.permute.xlu0 %813
    %v816 = vadd.f32 %v805, %v814
    %v817 = vsel %vm792, %v816, %v740
    %v818 = vpack.c.bf16 %v817, %v817
    %s819 = smul.u32 6, 2
    %s820 = smul.addr %s819, 8
    %s821 = scalar_lea.vmem [#allocation2], %s820
    %v822 = vld [vmem:[%s821] sm:$0xff]
    %v823 = vld [vmem:[%s821 + $0x8] sm:$0xff]
    %v825 = vsel %vm436, %v818, 0
    %827 = vmatprep.subr.bf16.mxu0 0
    %828 = vmatpush1.bf16.msra.mxu0 0
    %829 = vmatprep.subr.bf16.mxu0 0
    %830 = vmatpush1.bf16.msra.mxu0 0
    %831 = vmatprep.subr.bf16.mxu0 0
    %832 = vmatpush1.bf16.msra.mxu0 0
    %833 = vmatprep.subr.bf16.mxu0 0
    %834 = vmatpush1.bf16.msra.mxu0 0
    %835 = vmatprep.subr.bf16.mxu0 %v427
    %836 = vmatpush1.bf16.msra.mxu0 %v426
    %837 = vmatprep.subr.bf16.mxu0 %v425
    %838 = vmatpush1.bf16.msra.mxu0 %v424
    %839 = vmatprep.subr.bf16.mxu0 %v423
    %840 = vmatpush1.bf16.msra.mxu0 %v422
    %841 = vmatprep.subr.bf16.mxu0 %v421
    %842 = vmatpush1.bf16.msra.mxu0 %v420
    %843 = vmatprep.subr.bf16.mxu0 0
    %844 = vmatpush2.bf16.msra.mxu0 0
    %845 = vmatprep.subr.bf16.mxu0 0
    %846 = vmatpush2.bf16.msra.mxu0 0
    %847 = vmatprep.subr.bf16.mxu0 0
    %848 = vmatpush2.bf16.msra.mxu0 0
    %849 = vmatprep.subr.bf16.mxu0 0
    %850 = vmatpush2.bf16.msra.mxu0 0
    %851 = vmatprep.subr.bf16.mxu0 0
    %852 = vmatpush2.bf16.msra.mxu0 0
    %853 = vmatprep.subr.bf16.mxu0 0
    %854 = vmatpush2.bf16.msra.mxu0 0
    %855 = vmatprep.subr.bf16.mxu0 0
    %856 = vmatpush2.bf16.msra.mxu0 0
    %857 = vmatprep.subr.bf16.mxu0 0
    %858 = vmatpush2.bf16.msra.mxu0 0
    %859 = vmatprep.mubr.bf16.mxu0 0
    %860 = vmatmul.mubr.bf16.gmra.mxu0 %v825
    %v861 = vpop.f32.mrf.mxu0
    %v862 = vadd.f32 %v822, %v861
    %v863 = vpop.f32.mrf.mxu0
    %v864 = vadd.f32 %v823, %v863
    %v865 = vpop.f32.mrf.mxu0
    %v866 = vpop.f32.mrf.mxu0
    %867 = vdwg.mxu0
    %v868 = vadd.s32 %v352, 5
    %vm869 = vcmp.gt.s32.totalorder %v483, %v868
    %v870 = vxor.u32 %v862, 2147483648
    %v871 = vmul.f32 %v870, 1.442695
    %v872 = vpow.pop %v871
    %v873 = vadd.f32 %v872, 1.0
    %v874 = vrcp.pop %v873
    %v875 = vmul.f32 1.0, %v874
    %877 = vrot.lane.b32.xlu0 %v864, 64
    %v878 = vpop.permute.xlu0 %877
    %v880 = vmul.f32 %v875, %v878
    %v881 = vadd.f32 %v864, %v880
    %v882 = vtanh.pop %v881
    %v883 = vsub.f32 %v817, %v882
    %885 = vrot.lane.b32.xlu0 %v883, 64
    %v886 = vpop.permute.xlu0 %885
    %v888 = vmul.f32 %v875, %v886
    %890 = vrot.lane.b32.xlu0 %v888, 64
    %v891 = vpop.permute.xlu0 %890
    %v893 = vadd.f32 %v882, %v891
    %v894 = vsel %vm869, %v893, %v817
    %v895 = vpack.c.bf16 %v894, %v894
    %s896 = smul.u32 7, 2
    %s897 = smul.addr %s896, 8
    %s898 = scalar_lea.vmem [#allocation2], %s897
    %v899 = vld [vmem:[%s898] sm:$0xff]
    %v900 = vld [vmem:[%s898 + $0x8] sm:$0xff]
    %v902 = vsel %vm436, %v895, 0
    %904 = vmatprep.subr.bf16.mxu0 0
    %905 = vmatpush1.bf16.msra.mxu0 0
    %906 = vmatprep.subr.bf16.mxu0 0
    %907 = vmatpush1.bf16.msra.mxu0 0
    %908 = vmatprep.subr.bf16.mxu0 0
    %909 = vmatpush1.bf16.msra.mxu0 0
    %910 = vmatprep.subr.bf16.mxu0 0
    %911 = vmatpush1.bf16.msra.mxu0 0
    %912 = vmatprep.subr.bf16.mxu0 %v427
    %913 = vmatpush1.bf16.msra.mxu0 %v426
    %914 = vmatprep.subr.bf16.mxu0 %v425
    %915 = vmatpush1.bf16.msra.mxu0 %v424
    %916 = vmatprep.subr.bf16.mxu0 %v423
    %917 = vmatpush1.bf16.msra.mxu0 %v422
    %918 = vmatprep.subr.bf16.mxu0 %v421
    %919 = vmatpush1.bf16.msra.mxu0 %v420
    %920 = vmatprep.subr.bf16.mxu0 0
    %921 = vmatpush2.bf16.msra.mxu0 0
    %922 = vmatprep.subr.bf16.mxu0 0
    %923 = vmatpush2.bf16.msra.mxu0 0
    %924 = vmatprep.subr.bf16.mxu0 0
    %925 = vmatpush2.bf16.msra.mxu0 0
    %926 = vmatprep.subr.bf16.mxu0 0
    %927 = vmatpush2.bf16.msra.mxu0 0
    %928 = vmatprep.subr.bf16.mxu0 0
    %929 = vmatpush2.bf16.msra.mxu0 0
    %930 = vmatprep.subr.bf16.mxu0 0
    %931 = vmatpush2.bf16.msra.mxu0 0
    %932 = vmatprep.subr.bf16.mxu0 0
    %933 = vmatpush2.bf16.msra.mxu0 0
    %934 = vmatprep.subr.bf16.mxu0 0
    %935 = vmatpush2.bf16.msra.mxu0 0
    %936 = vmatprep.mubr.bf16.mxu0 0
    %937 = vmatmul.mubr.bf16.gmra.mxu0 %v902
    %v938 = vpop.f32.mrf.mxu0
    %v939 = vadd.f32 %v899, %v938
    %v940 = vpop.f32.mrf.mxu0
    %v941 = vadd.f32 %v900, %v940
    %v942 = vpop.f32.mrf.mxu0
    %v943 = vpop.f32.mrf.mxu0
    %944 = vdwg.mxu0
    %v945 = vadd.s32 %v352, 6
    %vm946 = vcmp.gt.s32.totalorder %v483, %v945
    %v947 = vxor.u32 %v939, 2147483648
    %v948 = vmul.f32 %v947, 1.442695
    %v949 = vpow.pop %v948
    %v950 = vadd.f32 %v949, 1.0
    %v951 = vrcp.pop %v950
    %v952 = vmul.f32 1.0, %v951
    %954 = vrot.lane.b32.xlu0 %v941, 64
    %v955 = vpop.permute.xlu0 %954
    %v957 = vmul.f32 %v952, %v955
    %v958 = vadd.f32 %v941, %v957
    %v959 = vtanh.pop %v958
    %v960 = vsub.f32 %v894, %v959
    %962 = vrot.lane.b32.xlu0 %v960, 64
    %v963 = vpop.permute.xlu0 %962
    %v965 = vmul.f32 %v952, %v963
    %967 = vrot.lane.b32.xlu0 %v965, 64
    %v968 = vpop.permute.xlu0 %967
    %v970 = vadd.f32 %v959, %v968
    %v971 = vsel %vm946, %v970, %v894
    %v972 = vpack.c.bf16 %v971, %v971
    %v974 = vsel %vm436, %v972, 0
    %976 = vmatprep.subr.bf16.mxu0 0
    %977 = vmatpush1.bf16.msra.mxu0 0
    %978 = vmatprep.subr.bf16.mxu0 0
    %979 = vmatpush1.bf16.msra.mxu0 0
    %980 = vmatprep.subr.bf16.mxu0 0
    %981 = vmatpush1.bf16.msra.mxu0 0
    %982 = vmatprep.subr.bf16.mxu0 0
    %983 = vmatpush1.bf16.msra.mxu0 0
    %984 = vmatprep.subr.bf16.mxu0 %v427
    %985 = vmatpush1.bf16.msra.mxu0 %v426
    %986 = vmatprep.subr.bf16.mxu0 %v425
    %987 = vmatpush1.bf16.msra.mxu0 %v424
    %988 = vmatprep.subr.bf16.mxu0 %v423
    %989 = vmatpush1.bf16.msra.mxu0 %v422
    %990 = vmatprep.subr.bf16.mxu0 %v421
    %991 = vmatpush1.bf16.msra.mxu0 %v420
    %992 = vmatprep.subr.bf16.mxu0 0
    %993 = vmatpush2.bf16.msra.mxu0 0
    %994 = vmatprep.subr.bf16.mxu0 0
    %995 = vmatpush2.bf16.msra.mxu0 0
    %996 = vmatprep.subr.bf16.mxu0 0
    %997 = vmatpush2.bf16.msra.mxu0 0
    %998 = vmatprep.subr.bf16.mxu0 0
    %999 = vmatpush2.bf16.msra.mxu0 0
    %1000 = vmatprep.subr.bf16.mxu0 0
    %1001 = vmatpush2.bf16.msra.mxu0 0
    %1002 = vmatprep.subr.bf16.mxu0 0
    %1003 = vmatpush2.bf16.msra.mxu0 0
    %1004 = vmatprep.subr.bf16.mxu0 0
    %1005 = vmatpush2.bf16.msra.mxu0 0
    %1006 = vmatprep.subr.bf16.mxu0 0
    %1007 = vmatpush2.bf16.msra.mxu0 0
    %1008 = vmatprep.mubr.bf16.mxu0 0
    %1009 = vmatmul.mubr.bf16.gmra.mxu0 %v974
    %v1010 = vpop.f32.mrf.mxu0
    %v1011 = vadd.f32 %v899, %v1010
    %v1012 = vpop.f32.mrf.mxu0
    %v1013 = vadd.f32 %v900, %v1012
    %v1014 = vpop.f32.mrf.mxu0
    %v1015 = vpop.f32.mrf.mxu0
    %1016 = vdwg.mxu0
    %v1017 = vadd.s32 %v352, 7
    %vm1018 = vcmp.gt.s32.totalorder %v483, %v1017
    %v1019 = vxor.u32 %v1011, 2147483648
    %v1020 = vmul.f32 %v1019, 1.442695
    %v1021 = vpow.pop %v1020
    %v1022 = vadd.f32 %v1021, 1.0
    %v1023 = vrcp.pop %v1022
    %v1024 = vmul.f32 1.0, %v1023
    %1026 = vrot.lane.b32.xlu0 %v1013, 64
    %v1027 = vpop.permute.xlu0 %1026
    %v1029 = vmul.f32 %v1024, %v1027
    %v1030 = vadd.f32 %v1013, %v1029
    %v1031 = vtanh.pop %v1030
    %v1032 = vsub.f32 %v971, %v1031
    %1034 = vrot.lane.b32.xlu0 %v1032, 64
    %v1035 = vpop.permute.xlu0 %1034
    %v1037 = vmul.f32 %v1024, %v1035
    %1039 = vrot.lane.b32.xlu0 %v1037, 64
    %v1040 = vpop.permute.xlu0 %1039
    %v1042 = vadd.f32 %v1031, %v1040
    %v1043 = vsel %vm1018, %v1042, %v971
    %1044 = vst.msk [vmem:[#allocation9] sm:$0xff] %vm436, %v1043
    // Predicated region
    $region42: #{tpu_custom_call.1} parent=1 // pred_check
      _
    $region43: #{tpu_custom_call.1} parent=1 // pred_check_branch
      %1046 = sbr.rel (0) target = $region45
    $region44: #{tpu_custom_call.1} parent=1 // pred_region
      %s1048 = ssub.s32 128, 128
      %1049 = vsyncadd [#allocation5], %s1048
      %s1051 = sshll.u32 [#allocation9], 4
      %s1052 = int_to_ptr.vmem [resolvable:$true] %s1051
      %1054 = dma.vmem_to_hbm [thread:$0]  %s1052, 128, %s7, [#allocation5]
    $region45: #{tpu_custom_call.1} parent=1 // pred_fallthru
      _
    // Predicated region
    $region46: #{tpu_custom_call.1} parent=1 // pred_check
      _
    $region47: #{tpu_custom_call.1} parent=1 // pred_check_branch
      %1056 = sbr.rel (0) target = $region49
    $region48: #{tpu_custom_call.1} parent=1 // pred_region
      %1057 = dma.done [#allocation5], 128
    $region49: #{tpu_custom_call.1} parent=1 // pred_fallthru
      _
    %1058 = vsyncpa [#allocation4], 1
    %1059 = vsyncpa [#allocation7], 1
    %1060 = vsyncpa [#allocation5], 1

</llo_original>
